<compile_context>
chip_gen: v6e
topology: v6e:2x2x1
jax: 0.10.0
libtpu: 0.0.40
codegen_flags: <defaults>
</compile_context>

<pallas_src>
import jax
import jax.numpy as jnp
from jax import lax
from jax.experimental import pallas as pl
from jax.experimental.pallas import tpu as pltpu


# ---------------------------------------------------------------------------
# Pallas kernel: one grid step == TB bags.
# ---------------------------------------------------------------------------
def dsmil_kernel(bags_ref,      # (TB, N, F)   bf16
                 w_enc_ref,     # (F, Z)       bf16
                 w_sa_ref,      # (Z, Z+1)     bf16   [w_a1.T | w_ic.T]
                 w_a2_ref,      # (Z, 1)       bf16
                 w_conv_ref,    # (Z, Z)       bf16
                 w_bag_ref,     # (Z, P)       bf16   (BN2 folded, lane-padded)
                 aux_ref,       # (5, Z)       f32    [b_enc; bn1_s; bn1_b; b_a1; b_conv]
                 b_bag_ref,     # (1, P)       f32    (BN2 folded, lane-padded)
                 out_ref):      # (TB, P)      f32
    TB, N, F = bags_ref.shape
    Z = w_conv_ref.shape[0]

    b_enc  = aux_ref[0:1, :]
    bn1_s  = aux_ref[1:2, :]
    bn1_b  = aux_ref[2:3, :]
    b_a1   = aux_ref[3:4, :]
    b_conv = aux_ref[4:5, :]

    # ---- instance encoder: Linear -> ReLU -> BatchNorm1d(eval) -> Dropout(id)
    x2 = bags_ref[...].reshape(TB * N, F)                              # bf16
    feat = jnp.dot(x2, w_enc_ref[...],
                   preferred_element_type=jnp.float32) + b_enc         # (TB*N, Z)
    feat = jnp.maximum(feat, 0.0)
    feat = feat * bn1_s + bn1_b                                        # eval-mode BN1

    # ---- fused instance-classifier + attention-hidden matmul (one MXU pass)
    p = jnp.dot(feat.astype(jnp.bfloat16), w_sa_ref[...],
                preferred_element_type=jnp.float32)                    # (TB*N, Z+1)
    A      = p[:, :Z].reshape(TB, N, Z)          # feat @ w_a1.T  (bias added later)
    scores = p[:, Z:Z + 1].reshape(TB, N, 1)     # instance scores (b_ic dropped:
                                                 # constant shift, argmax-invariant)

    # ---- per-bag critical instance: first-occurrence argmax (torch.max semantics)
    # NOTE: assumes finite scores; a NaN score would make the equality never fire.
    iota = lax.broadcasted_iota(jnp.int32, (TB, N, 1), 1)
    max_val = jnp.max(scores, axis=1, keepdims=True)                   # (TB,1,1)
    first_idx = jnp.min(jnp.where(scores == max_val, iota, N),
                        axis=1, keepdims=True)                         # (TB,1,1)
    onehot = (iota == first_idx).astype(jnp.float32)                   # (TB,N,1)
    # (feat - critical) @ w_a1.T  ==  A - A[critical]  (linearity)
    crit_A = jnp.sum(onehot * A, axis=1, keepdims=True)                # (TB,1,Z)

    # ---- attention: Tanh -> Linear, softmax over instances
    h = jnp.tanh(A - crit_A + b_a1)                                    # (TB,N,Z)
    logits = jnp.dot(h.reshape(TB * N, Z).astype(jnp.bfloat16), w_a2_ref[...],
                     preferred_element_type=jnp.float32).reshape(TB, N, 1)
    # (b_a2 dropped: constant shift, softmax-invariant)
    m = jnp.max(logits, axis=1, keepdims=True)
    e = jnp.exp(logits - m)
    attn = e * pl.reciprocal(jnp.sum(e, axis=1, keepdims=True), approx=True)

    # ---- bag embedding (attention-weighted sum of instance features)
    feat3 = feat.reshape(TB, N, Z)
    bag_emb = jnp.sum(attn * feat3, axis=1)                            # (TB, Z) f32

    # ---- Conv1d(z_dim, z_dim, k=1) on a length-1 sequence == Linear
    conv = jnp.dot(bag_emb.astype(jnp.bfloat16), w_conv_ref[...],
                   preferred_element_type=jnp.float32) + b_conv        # (TB, Z)

    # ---- bag classifier (BN2 + Dropout(id) + Linear, BN2 pre-folded on host)
    out = jnp.dot(conv.astype(jnp.bfloat16), w_bag_ref[...],
                  preferred_element_type=jnp.float32) + b_bag_ref[...] # (TB, P)
    out_ref[...] = out


# ---------------------------------------------------------------------------
# Host-side one-time parameter prep (transpose / fuse / fold / pack / bf16)
# ---------------------------------------------------------------------------
def prepare_params(params):
    f32, bf = jnp.float32, jnp.bfloat16
    Z = params["w_enc"].shape[0]
    n_out = params["w_bag"].shape[0]
    P = ((n_out + 127) // 128) * 128            # lane-padded output head width

    # fused [attention-hidden | instance-classifier] weight, (Z, Z+1)
    w_sa = jnp.concatenate([params["w_a1"].T, params["w_ic"].T], axis=1)

    # fold eval-mode BatchNorm1d of the bag classifier into its Linear:
    #   (y*s2 + b2) @ W.T + b  ==  y @ (W*s2).T + (b2 @ W.T + b)
    w_bag_f = (params["w_bag"] * params["bn2_s"]).T                    # (Z, n_out)
    b_bag_f = params["b_bag"] + params["bn2_b"] @ params["w_bag"].T    # (1, n_out)
    w_bag_pad = jnp.zeros((Z, P), f32).at[:, :n_out].set(w_bag_f)
    b_bag_pad = jnp.zeros((1, P), f32).at[:, :n_out].set(b_bag_f)

    # pack the remaining per-feature f32 vectors into one array (one DMA window)
    aux = jnp.concatenate([params["b_enc"], params["bn1_s"], params["bn1_b"],
                           params["b_a1"], params["b_conv"]], axis=0)  # (5, Z)

    kp = {
        "w_enc":  params["w_enc"].T.astype(bf),     # (F, Z)
        "w_sa":   w_sa.astype(bf),                  # (Z, Z+1)
        "w_a2":   params["w_a2"].T.astype(bf),      # (Z, 1)
        "w_conv": params["w_conv"].T.astype(bf),    # (Z, Z)
        "w_bag":  w_bag_pad.astype(bf),             # (Z, P)
        "aux":    aux.astype(f32),                  # (5, Z)
        "b_bag":  b_bag_pad,                        # (1, P)
    }
    return kp, n_out


# ---------------------------------------------------------------------------
# Wrapper
# ---------------------------------------------------------------------------
def dsmil_forward(bags, params, *, bags_per_step=8):
    B, N, F = bags.shape
    kp, n_out = prepare_params(params)
    P = kp["b_bag"].shape[1]

    TB = min(bags_per_step, B)
    assert B % TB == 0, "batch must be divisible by bags_per_step"
    assert TB == B or TB % 8 == 0, "output sublane tiling needs TB % 8 == 0"
    # NOTE: for very large N/F, add a second 'arbitrary' grid axis over N with
    # VMEM accumulators and/or set vmem_limit_bytes (v7x has 64 MiB VMEM).

    order = ("w_enc", "w_sa", "w_a2", "w_conv", "w_bag", "aux", "b_bag")
    in_specs = [pl.BlockSpec((TB, N, F), lambda b: (b, 0, 0))]
    for k in order:
        nd = kp[k].ndim
        in_specs.append(pl.BlockSpec(kp[k].shape, lambda b, _nd=nd: (0,) * _nd))

    out = pl.pallas_call(
        dsmil_kernel,
        out_shape=jax.ShapeDtypeStruct((B, P), jnp.float32),
        grid=(B // TB,),
        in_specs=in_specs,
        out_specs=pl.BlockSpec((TB, P), lambda b: (b, 0)),
        compiler_params=pltpu.CompilerParams(
            dimension_semantics=("parallel",)),
    )(bags.astype(jnp.bfloat16), *[kp[k] for k in order])

    return out[:, :n_out]


# ---------------------------------------------------------------------------
# Deterministic parameter init (Xavier-normal linears + zero bias; eval-mode BN;
# Conv1d untouched by initialize_weights -> default-style init with nonzero bias).
# ---------------------------------------------------------------------------
def make_params(key, n_feats, z_dim, n_out):
    ks = jax.random.split(key, 7)

    def xavier(k, fan_out, fan_in):
        std = (2.0 / (fan_in + fan_out)) ** 0.5
        return (std * jax.random.normal(k, (fan_out, fan_in))).astype(jnp.float32)

    eps = 1e-5
    bn_scale = jnp.full((1, z_dim), 1.0 / jnp.sqrt(1.0 + eps), jnp.float32)
    bn_shift = jnp.zeros((1, z_dim), jnp.float32)
    bound = 1.0 / (z_dim ** 0.5)

    return {
        # instance_encoder: Linear(n_feats, z_dim) -> ReLU -> BN -> Dropout
        "w_enc": xavier(ks[0], z_dim, n_feats),
        "b_enc": jnp.zeros((1, z_dim), jnp.float32),
        "bn1_s": bn_scale, "bn1_b": bn_shift,
        # instance_classifier: Linear(z_dim, 1)
        "w_ic": xavier(ks[1], 1, z_dim),
        "b_ic": jnp.zeros((1, 1), jnp.float32),
        # attention: Linear(z_dim, z_dim) -> Tanh -> Linear(z_dim, 1)
        "w_a1": xavier(ks[2], z_dim, z_dim),
        "b_a1": jnp.zeros((1, z_dim), jnp.float32),
        "w_a2": xavier(ks[3], 1, z_dim),
        "b_a2": jnp.zeros((1, 1), jnp.float32),
        # conv1d(z_dim, z_dim, k=1): weight (Z, Z, 1) collapsed to (Z, Z)
        "w_conv": (bound * jax.random.normal(ks[4], (z_dim, z_dim))).astype(jnp.float32),
        "b_conv": jax.random.uniform(ks[5], (1, z_dim), jnp.float32, -bound, bound),
        # bag_classifier: BN -> Dropout -> Linear(z_dim, n_out)
        "bn2_s": bn_scale, "bn2_b": bn_shift,
        "w_bag": xavier(ks[6], n_out, z_dim),
        "b_bag": jnp.zeros((1, n_out), jnp.float32),
    }


# Pure-JAX reference with PyTorch-eval semantics; matmul operands are cast to
# bf16 (f32 accumulation) to mirror the kernel's MXU input precision.
def dsmil_reference(bags, p):
    def mm(a, w):
        return jnp.dot(a.astype(jnp.bfloat16), w.T.astype(jnp.bfloat16),
                       preferred_element_type=jnp.float32)
    feat = jnp.maximum(mm(bags, p["w_enc"]) + p["b_enc"], 0.0)
    feat = feat * p["bn1_s"] + p["bn1_b"]                        # (B, N, Z)
    scores = (mm(feat, p["w_ic"]) + p["b_ic"])[..., 0]           # (B, N)
    max_idx = jnp.argmax(scores, axis=1)
    critical = feat[jnp.arange(bags.shape[0]), max_idx]          # (B, Z)
    h = jnp.tanh(mm(feat - critical[:, None], p["w_a1"]) + p["b_a1"])
    logits = mm(h, p["w_a2"]) + p["b_a2"]                        # (B, N, 1)
    attn = jax.nn.softmax(logits, axis=1)
    bag_emb = jnp.sum(attn * feat, axis=1)                       # (B, Z)
    conv = mm(bag_emb, p["w_conv"]) + p["b_conv"]
    conv = conv * p["bn2_s"] + p["bn2_b"]
    return mm(conv, p["w_bag"]) + p["b_bag"]


if __name__ == "__main__":
    B, N, F, Z, n_out = 16, 32, 64, 32, 4

    key = jax.random.PRNGKey(0)
    k_bags, k_params = jax.random.split(key)
    bags = jax.random.normal(k_bags, (B, N, F), dtype=jnp.float32)
    params = make_params(k_params, F, Z, n_out)

    out = dsmil_forward(bags, params, bags_per_step=8)
    out = jax.block_until_ready(out)

    ref = dsmil_reference(bags, params)
    assert out.shape == (B, n_out)
    assert jnp.allclose(out, ref, atol=2e-2, rtol=2e-2), (out, ref)

    print("KERNEL_OK")
</pallas_src>

<mosaic_0001>
module attributes {stable_mosaic.version = 11 : i64} {
  func.func @dsmil_kernel(%arg0: i32, %arg1: memref<8x32x64xbf16, #tpu.memory_space<vmem>>, %arg2: memref<64x32xbf16, #tpu.memory_space<vmem>>, %arg3: memref<32x33xbf16, #tpu.memory_space<vmem>>, %arg4: memref<32x1xbf16, #tpu.memory_space<vmem>>, %arg5: memref<32x32xbf16, #tpu.memory_space<vmem>>, %arg6: memref<32x128xbf16, #tpu.memory_space<vmem>>, %arg7: memref<5x32xf32, #tpu.memory_space<vmem>>, %arg8: memref<1x128xf32, #tpu.memory_space<vmem>>, %arg9: memref<8x128xf32, #tpu.memory_space<vmem>>) attributes {dimension_semantics = [#tpu.dimension_semantics<parallel>], iteration_bounds = array<i64: 2>, scalar_prefetch = 0 : i64, scratch_operands = 0 : i64, tpu.core_type = #tpu.core_type<tc>, window_params = [{transform_indices = @transform_0, window_bounds = array<i64: 8, 32, 64>}, {pipeline_mode = #tpu.pipeline_mode<synchronous>, transform_indices = @transform_1, window_bounds = array<i64: 64, 32>}, {pipeline_mode = #tpu.pipeline_mode<synchronous>, transform_indices = @transform_2, window_bounds = array<i64: 32, 33>}, {pipeline_mode = #tpu.pipeline_mode<synchronous>, transform_indices = @transform_3, window_bounds = array<i64: 32, 1>}, {pipeline_mode = #tpu.pipeline_mode<synchronous>, transform_indices = @transform_4, window_bounds = array<i64: 32, 32>}, {pipeline_mode = #tpu.pipeline_mode<synchronous>, transform_indices = @transform_5, window_bounds = array<i64: 32, 128>}, {pipeline_mode = #tpu.pipeline_mode<synchronous>, transform_indices = @transform_6, window_bounds = array<i64: 5, 32>}, {pipeline_mode = #tpu.pipeline_mode<synchronous>, transform_indices = @transform_7, window_bounds = array<i64: 1, 128>}, {transform_indices = @transform_8, window_bounds = array<i64: 8, 128>}]} {
    %c0 = arith.constant 0 : index
    %c0_0 = arith.constant 0 : index
    %0 = vector.load %arg7[%c0, %c0_0] : memref<5x32xf32, #tpu.memory_space<vmem>>, vector<1x32xf32>
    %c1 = arith.constant 1 : index
    %c0_1 = arith.constant 0 : index
    %1 = vector.load %arg7[%c1, %c0_1] : memref<5x32xf32, #tpu.memory_space<vmem>>, vector<1x32xf32>
    %c2 = arith.constant 2 : index
    %c0_2 = arith.constant 0 : index
    %2 = vector.load %arg7[%c2, %c0_2] : memref<5x32xf32, #tpu.memory_space<vmem>>, vector<1x32xf32>
    %c3 = arith.constant 3 : index
    %c0_3 = arith.constant 0 : index
    %3 = vector.load %arg7[%c3, %c0_3] : memref<5x32xf32, #tpu.memory_space<vmem>>, vector<1x32xf32>
    %c4 = arith.constant 4 : index
    %c0_4 = arith.constant 0 : index
    %4 = vector.load %arg7[%c4, %c0_4] : memref<5x32xf32, #tpu.memory_space<vmem>>, vector<1x32xf32>
    %c0_5 = arith.constant 0 : index
    %c0_6 = arith.constant 0 : index
    %c0_7 = arith.constant 0 : index
    %5 = vector.load %arg1[%c0_5, %c0_6, %c0_7] : memref<8x32x64xbf16, #tpu.memory_space<vmem>>, vector<8x32x64xbf16>
    %6 = vector.shape_cast %5 : vector<8x32x64xbf16> to vector<256x64xbf16>
    %c0_8 = arith.constant 0 : index
    %c0_9 = arith.constant 0 : index
    %7 = vector.load %arg2[%c0_8, %c0_9] : memref<64x32xbf16, #tpu.memory_space<vmem>>, vector<64x32xbf16>
    %cst = arith.constant dense<0.000000e+00> : vector<256x32xf32>
    %8 = tpu.matmul %6, %7, %cst {dimension_numbers = #tpu.dot_dimension_numbers<[1], [0], [0], [1], [0, 0, 1, 1], [], []>} : vector<256x64xbf16>, vector<64x32xbf16>, vector<256x32xf32> -> vector<256x32xf32>
    %9 = vector.broadcast %0 : vector<1x32xf32> to vector<256x32xf32>
    %10 = arith.addf %8, %9 : vector<256x32xf32>
    %cst_10 = arith.constant 0.000000e+00 : f32
    %11 = vector.broadcast %cst_10 : f32 to vector<256x32xf32>
    %12 = arith.maximumf %10, %11 : vector<256x32xf32>
    %13 = vector.broadcast %1 : vector<1x32xf32> to vector<256x32xf32>
    %14 = arith.mulf %12, %13 : vector<256x32xf32>
    %15 = vector.broadcast %2 : vector<1x32xf32> to vector<256x32xf32>
    %16 = arith.addf %14, %15 : vector<256x32xf32>
    %17 = arith.truncf %16 : vector<256x32xf32> to vector<256x32xbf16>
    %c0_11 = arith.constant 0 : index
    %c0_12 = arith.constant 0 : index
    %18 = vector.load %arg3[%c0_11, %c0_12] : memref<32x33xbf16, #tpu.memory_space<vmem>>, vector<32x33xbf16>
    %cst_13 = arith.constant dense<0.000000e+00> : vector<256x33xf32>
    %19 = tpu.matmul %17, %18, %cst_13 {dimension_numbers = #tpu.dot_dimension_numbers<[1], [0], [0], [1], [0, 0, 1, 1], [], []>} : vector<256x32xbf16>, vector<32x33xbf16>, vector<256x33xf32> -> vector<256x33xf32>
    %20 = vector.extract_strided_slice %19 {offsets = [0, 0], sizes = [256, 32], strides = [1, 1]} : vector<256x33xf32> to vector<256x32xf32>
    %21 = vector.shape_cast %20 : vector<256x32xf32> to vector<8x32x32xf32>
    %22 = vector.extract_strided_slice %19 {offsets = [0, 32], sizes = [256, 1], strides = [1, 1]} : vector<256x33xf32> to vector<256x1xf32>
    %23 = vector.shape_cast %22 : vector<256x1xf32> to vector<8x32x1xf32>
    %24 = tpu.iota {dimensions = array<i32: 1>} : vector<8x32x1xi32>
    %cst_14 = arith.constant dense<0xFF800000> : vector<8x1xf32>
    %25 = vector.multi_reduction <maximumf>, %23, %cst_14 [1] : vector<8x32x1xf32> to vector<8x1xf32>
    %26 = vector.shape_cast %25 : vector<8x1xf32> to vector<8x1x1xf32>
    %27 = vector.broadcast %26 : vector<8x1x1xf32> to vector<8x32x1xf32>
    %28 = arith.cmpf oeq, %23, %27 : vector<8x32x1xf32>
    %c32_i32 = arith.constant 32 : i32
    %29 = vector.broadcast %c32_i32 : i32 to vector<8x32x1xi32>
    %30 = arith.select %28, %24, %29 : vector<8x32x1xi1>, vector<8x32x1xi32>
    %cst_15 = arith.constant dense<2147483647> : vector<8x1xi32>
    %31 = vector.multi_reduction <minsi>, %30, %cst_15 [1] : vector<8x32x1xi32> to vector<8x1xi32>
    %32 = vector.shape_cast %31 : vector<8x1xi32> to vector<8x1x1xi32>
    %33 = vector.broadcast %32 : vector<8x1x1xi32> to vector<8x32x1xi32>
    %34 = arith.cmpi eq, %24, %33 : vector<8x32x1xi32>
    %35 = arith.extui %34 : vector<8x32x1xi1> to vector<8x32x1xi32>
    %36 = arith.sitofp %35 : vector<8x32x1xi32> to vector<8x32x1xf32>
    %37 = vector.broadcast %36 : vector<8x32x1xf32> to vector<8x32x32xf32>
    %38 = arith.mulf %37, %21 : vector<8x32x32xf32>
    %cst_16 = arith.constant dense<0.000000e+00> : vector<8x32xf32>
    %39 = vector.multi_reduction <add>, %38, %cst_16 [1] : vector<8x32x32xf32> to vector<8x32xf32>
    %40 = vector.shape_cast %39 : vector<8x32xf32> to vector<8x1x32xf32>
    %41 = vector.broadcast %40 : vector<8x1x32xf32> to vector<8x32x32xf32>
    %42 = arith.subf %21, %41 : vector<8x32x32xf32>
    %43 = vector.shape_cast %3 : vector<1x32xf32> to vector<1x1x32xf32>
    %44 = vector.broadcast %43 : vector<1x1x32xf32> to vector<8x32x32xf32>
    %45 = arith.addf %42, %44 : vector<8x32x32xf32>
    %46 = math.tanh %45 : vector<8x32x32xf32>
    %47 = vector.shape_cast %46 : vector<8x32x32xf32> to vector<256x32xf32>
    %48 = arith.truncf %47 : vector<256x32xf32> to vector<256x32xbf16>
    %c0_17 = arith.constant 0 : index
    %c0_18 = arith.constant 0 : index
    %49 = vector.load %arg4[%c0_17, %c0_18] : memref<32x1xbf16, #tpu.memory_space<vmem>>, vector<32x1xbf16>
    %cst_19 = arith.constant dense<0.000000e+00> : vector<256x1xf32>
    %50 = tpu.matmul %48, %49, %cst_19 {dimension_numbers = #tpu.dot_dimension_numbers<[1], [0], [0], [1], [0, 0, 1, 1], [], []>} : vector<256x32xbf16>, vector<32x1xbf16>, vector<256x1xf32> -> vector<256x1xf32>
    %51 = vector.shape_cast %50 : vector<256x1xf32> to vector<8x32x1xf32>
    %cst_20 = arith.constant dense<0xFF800000> : vector<8x1xf32>
    %52 = vector.multi_reduction <maximumf>, %51, %cst_20 [1] : vector<8x32x1xf32> to vector<8x1xf32>
    %53 = vector.shape_cast %52 : vector<8x1xf32> to vector<8x1x1xf32>
    %54 = vector.broadcast %53 : vector<8x1x1xf32> to vector<8x32x1xf32>
    %55 = arith.subf %51, %54 : vector<8x32x1xf32>
    %56 = math.exp %55 : vector<8x32x1xf32>
    %cst_21 = arith.constant dense<0.000000e+00> : vector<8x1xf32>
    %57 = vector.multi_reduction <add>, %56, %cst_21 [1] : vector<8x32x1xf32> to vector<8x1xf32>
    %58 = vector.shape_cast %57 : vector<8x1xf32> to vector<8x1x1xf32>
    %59 = tpu.reciprocal %58 {approx = true} : vector<8x1x1xf32> -> vector<8x1x1xf32>
    %60 = vector.broadcast %59 : vector<8x1x1xf32> to vector<8x32x1xf32>
    %61 = arith.mulf %56, %60 : vector<8x32x1xf32>
    %62 = vector.shape_cast %16 : vector<256x32xf32> to vector<8x32x32xf32>
    %63 = vector.broadcast %61 : vector<8x32x1xf32> to vector<8x32x32xf32>
    %64 = arith.mulf %63, %62 : vector<8x32x32xf32>
    %cst_22 = arith.constant dense<0.000000e+00> : vector<8x32xf32>
    %65 = vector.multi_reduction <add>, %64, %cst_22 [1] : vector<8x32x32xf32> to vector<8x32xf32>
    %66 = arith.truncf %65 : vector<8x32xf32> to vector<8x32xbf16>
    %c0_23 = arith.constant 0 : index
    %c0_24 = arith.constant 0 : index
    %67 = vector.load %arg5[%c0_23, %c0_24] : memref<32x32xbf16, #tpu.memory_space<vmem>>, vector<32x32xbf16>
    %cst_25 = arith.constant dense<0.000000e+00> : vector<8x32xf32>
    %68 = tpu.matmul %66, %67, %cst_25 {dimension_numbers = #tpu.dot_dimension_numbers<[1], [0], [0], [1], [0, 0, 1, 1], [], []>} : vector<8x32xbf16>, vector<32x32xbf16>, vector<8x32xf32> -> vector<8x32xf32>
    %69 = vector.broadcast %4 : vector<1x32xf32> to vector<8x32xf32>
    %70 = arith.addf %68, %69 : vector<8x32xf32>
    %71 = arith.truncf %70 : vector<8x32xf32> to vector<8x32xbf16>
    %c0_26 = arith.constant 0 : index
    %c0_27 = arith.constant 0 : index
    %72 = vector.load %arg6[%c0_26, %c0_27] : memref<32x128xbf16, #tpu.memory_space<vmem>>, vector<32x128xbf16>
    %cst_28 = arith.constant dense<0.000000e+00> : vector<8x128xf32>
    %73 = tpu.matmul %71, %72, %cst_28 {dimension_numbers = #tpu.dot_dimension_numbers<[1], [0], [0], [1], [0, 0, 1, 1], [], []>} : vector<8x32xbf16>, vector<32x128xbf16>, vector<8x128xf32> -> vector<8x128xf32>
    %c0_29 = arith.constant 0 : index
    %c0_30 = arith.constant 0 : index
    %74 = vector.load %arg8[%c0_29, %c0_30] : memref<1x128xf32, #tpu.memory_space<vmem>>, vector<1x128xf32>
    %75 = vector.broadcast %74 : vector<1x128xf32> to vector<8x128xf32>
    %76 = arith.addf %73, %75 : vector<8x128xf32>
    %c0_31 = arith.constant 0 : index
    %c0_32 = arith.constant 0 : index
    %77 = vector.load %arg9[%c0_31, %c0_32] : memref<8x128xf32, #tpu.memory_space<vmem>>, vector<8x128xf32>
    tpu.vector_store %arg9[%c0_31, %c0_32], %76 {strides = array<i32>} : memref<8x128xf32, #tpu.memory_space<vmem>>, vector<8x128xf32>,
    return
  }
  func.func @transform_0(%arg0: i32) -> (i32, i32, i32) {
    %c0_i32 = arith.constant 0 : i32
    %c0_i32_0 = arith.constant 0 : i32
    %c0_i32_1 = arith.constant 0 : i32
    return %arg0, %c0_i32, %c0_i32_0 : i32, i32, i32
  }
  func.func @transform_1(%arg0: i32) -> (i32, i32) {
    %c0_i32 = arith.constant 0 : i32
    %c0_i32_0 = arith.constant 0 : i32
    %c0_i32_1 = arith.constant 0 : i32
    return %c0_i32, %c0_i32_0 : i32, i32
  }
  func.func @transform_2(%arg0: i32) -> (i32, i32) {
    %c0_i32 = arith.constant 0 : i32
    %c0_i32_0 = arith.constant 0 : i32
    %c0_i32_1 = arith.constant 0 : i32
    return %c0_i32, %c0_i32_0 : i32, i32
  }
  func.func @transform_3(%arg0: i32) -> (i32, i32) {
    %c0_i32 = arith.constant 0 : i32
    %c0_i32_0 = arith.constant 0 : i32
    %c0_i32_1 = arith.constant 0 : i32
    return %c0_i32, %c0_i32_0 : i32, i32
  }
  func.func @transform_4(%arg0: i32) -> (i32, i32) {
    %c0_i32 = arith.constant 0 : i32
    %c0_i32_0 = arith.constant 0 : i32
    %c0_i32_1 = arith.constant 0 : i32
    return %c0_i32, %c0_i32_0 : i32, i32
  }
  func.func @transform_5(%arg0: i32) -> (i32, i32) {
    %c0_i32 = arith.constant 0 : i32
    %c0_i32_0 = arith.constant 0 : i32
    %c0_i32_1 = arith.constant 0 : i32
    return %c0_i32, %c0_i32_0 : i32, i32
  }
  func.func @transform_6(%arg0: i32) -> (i32, i32) {
    %c0_i32 = arith.constant 0 : i32
    %c0_i32_0 = arith.constant 0 : i32
    %c0_i32_1 = arith.constant 0 : i32
    return %c0_i32, %c0_i32_0 : i32, i32
  }
  func.func @transform_7(%arg0: i32) -> (i32, i32) {
    %c0_i32 = arith.constant 0 : i32
    %c0_i32_0 = arith.constant 0 : i32
    %c0_i32_1 = arith.constant 0 : i32
    return %c0_i32, %c0_i32_0 : i32, i32
  }
  func.func @transform_8(%arg0: i32) -> (i32, i32) {
    %c0_i32 = arith.constant 0 : i32
    %c0_i32_0 = arith.constant 0 : i32
    return %arg0, %c0_i32 : i32, i32
  }
}

</mosaic_0001>

<llo_original>
// kernel: tpu_custom_call.1
$region0: #{tpu_custom_call.1}
  #allocation0 [shape = 'u32[]', space=smem, size = 0x4, offset = 0x4, fixed_abs, tag = 'smem constant byte address 0x4 - core index']
  #allocation1 [shape = 'u32[144,128]{1,0:T(1,128)}', space=vmem, size = 0x12000, scoped, tag = 'internal scratch']
  %s0 = inlined_call_operand.hbm [shape: bf16[16,32,64], index: 0, kind: input, shape index: {}]
  %s1 = inlined_call_operand.vmem [shape: bf16[64,32], index: 1, kind: input, shape index: {}]
  %s2 = inlined_call_operand.vmem [shape: bf16[32,33], index: 2, kind: input, shape index: {}]
  %s3 = inlined_call_operand.vmem [shape: bf16[32,1], index: 3, kind: input, shape index: {}]
  %s4 = inlined_call_operand.vmem [shape: bf16[32,32], index: 4, kind: input, shape index: {}]
  %s5 = inlined_call_operand.vmem [shape: bf16[32,128], index: 5, kind: input, shape index: {}]
  %s6 = inlined_call_operand.vmem [shape: f32[5,32], index: 6, kind: input, shape index: {}]
  %s7 = inlined_call_operand.vmem [shape: f32[1,128], index: 7, kind: input, shape index: {}]
  %s8 = inlined_call_operand.hbm [shape: f32[16,128], index: 8, kind: output, shape index: {}]
  %s9 = sld [smem:[#allocation0]]
  $region69: #{tpu_custom_call.1} parent=0
    _
  %s11 = ssub.s32 1, %s9
  %s12 = scalar_select 0, %s11, %s9
  $region1: #{tpu_custom_call.1} parent=0
    #allocation2 [shape = 'u8[131072]{0}', space=vmem, size = 0x20000, scoped, tag = 'input window, operand 0']
    #allocation3 [shape = 's32[2]{0}', space=sflag, size = 0x8, scoped, tag = 'scoped memory for tpu_custom_call.1']
    #allocation4 [shape = 's32[2]{0}', space=sflag, size = 0x8, scoped, tag = 'scoped memory for tpu_custom_call.1']
    #allocation5 [shape = 'u8[8192]{0}', space=vmem, size = 0x2000, scoped, tag = 'output window, operand 0']
    %13 = vsyncpa [#allocation3], 0
    %s14 = scalar_lea.sflag [#allocation3], 1
    %15 = vsyncpa %s14, 0
    %16 = vsyncpa [#allocation4], 0
    %s17 = scalar_lea.sflag [#allocation4], 1
    %18 = vsyncpa %s17, 0
    loop: start=0, step=1, limit=4
    $region2: #{tpu_custom_call.1} parent=1 // loop_pre_header
      _
    $region3: #{tpu_custom_call.1} parent=1 // loop_header
      %s20 = sphi 0, %s24
      %p21 = scmp.ge.s32.totalorder %s20, 4
      %s30 = sphi 0, %s32
      %s33 = sphi 0, %s30
      %s34 = sphi 0, %s33
      %s50 = sphi 0, %s34
      %s54 = sphi 0, %s54
      %s56 = sphi 0, %s54
      %s57 = sphi 0, %s56
      %s71 = sphi 0, %s57
      %s75 = sphi 0, %s75
      %s77 = sphi 0, %s75
      %s78 = sphi 0, %s77
      %s92 = sphi 0, %s78
      %s96 = sphi 0, %s96
      %s98 = sphi 0, %s96
      %s99 = sphi 0, %s98
      %s113 = sphi 0, %s99
      %s117 = sphi 0, %s117
      %s119 = sphi 0, %s117
      %s120 = sphi 0, %s119
      %s134 = sphi 0, %s120
      %s138 = sphi 0, %s138
      %s140 = sphi 0, %s138
      %s141 = sphi 0, %s140
      %s155 = sphi 0, %s141
      %s159 = sphi 0, %s159
      %s161 = sphi 0, %s159
      %s162 = sphi 0, %s161
      %s176 = sphi 0, %s162
      %s180 = sphi 0, %s180
      %s182 = sphi 0, %s180
      %s183 = sphi 0, %s182
      %s197 = sphi 0, %s183
      %s203 = sphi 0, %s205
      %s206 = sphi 0, %s203
      %s207 = sphi 0, %s206
      %s223 = sphi 0, %s207
    $region4: #{tpu_custom_call.1} parent=1 // loop_header_branch
      %23 = sbr.rel (%p21) target = $region8
    $region5: #{tpu_custom_call.1} parent=1 // loop_body
      %s25 = ssub.s32 %s20, 1
      %s26 = ssub.s32 %s20, 2
      %s27 = sadd.s32 %s20, 1
      %s28 = ssub.s32 %s20, %s27
      %p29 = scmp.eq.s32.totalorder %s28, 0
      %s31 = sadd.s32 %s30, 1
      %s32 = scalar_select %p29, %s30, %s31
      %p35 = pneg %p29
      %p36 = scmp.eq.s32.totalorder %s20, 1
      %p37 = por %p35, %p36
      %p38 = scmp.ne.s32.totalorder %s30, %s33
      %p39 = scmp.eq.s32.totalorder %s20, 0
      %p40 = por %p38, %p39
      %p41 = scmp.ne.s32.totalorder %s30, %s33
      %p42 = scmp.eq.s32.totalorder %s25, 1
      %p43 = por %p41, %p42
      %p44 = scmp.ne.s32.totalorder %s33, %s34
      %p45 = scmp.eq.s32.totalorder %s25, 0
      %p46 = por %p44, %p45
      %p47 = scmp.ne.s32.totalorder %s33, %s34
      %p48 = scmp.eq.s32.totalorder %s26, 1
      %p49 = por %p47, %p48
      %p51 = scmp.ne.s32.totalorder %s34, %s50
      %p52 = scmp.eq.s32.totalorder %s26, 0
      %p53 = por %p51, %p52
      %s55 = sadd.s32 %s54, 1
      %p58 = scmp.eq.s32.totalorder %s20, 1
      %p59 = scmp.ne.s32.totalorder %s54, %s56
      %p60 = scmp.eq.s32.totalorder %s20, 0
      %p61 = por %p59, %p60
      %p62 = scmp.ne.s32.totalorder %s54, %s56
      %p63 = scmp.eq.s32.totalorder %s25, 1
      %p64 = por %p62, %p63
      %p65 = scmp.ne.s32.totalorder %s56, %s57
      %p66 = scmp.eq.s32.totalorder %s25, 0
      %p67 = por %p65, %p66
      %p68 = scmp.ne.s32.totalorder %s56, %s57
      %p69 = scmp.eq.s32.totalorder %s26, 1
      %p70 = por %p68, %p69
      %p72 = scmp.ne.s32.totalorder %s57, %s71
      %p73 = scmp.eq.s32.totalorder %s26, 0
      %p74 = por %p72, %p73
      %s76 = sadd.s32 %s75, 1
      %p79 = scmp.eq.s32.totalorder %s20, 1
      %p80 = scmp.ne.s32.totalorder %s75, %s77
      %p81 = scmp.eq.s32.totalorder %s20, 0
      %p82 = por %p80, %p81
      %p83 = scmp.ne.s32.totalorder %s75, %s77
      %p84 = scmp.eq.s32.totalorder %s25, 1
      %p85 = por %p83, %p84
      %p86 = scmp.ne.s32.totalorder %s77, %s78
      %p87 = scmp.eq.s32.totalorder %s25, 0
      %p88 = por %p86, %p87
      %p89 = scmp.ne.s32.totalorder %s77, %s78
      %p90 = scmp.eq.s32.totalorder %s26, 1
      %p91 = por %p89, %p90
      %p93 = scmp.ne.s32.totalorder %s78, %s92
      %p94 = scmp.eq.s32.totalorder %s26, 0
      %p95 = por %p93, %p94
      %s97 = sadd.s32 %s96, 1
      %p100 = scmp.eq.s32.totalorder %s20, 1
      %p101 = scmp.ne.s32.totalorder %s96, %s98
      %p102 = scmp.eq.s32.totalorder %s20, 0
      %p103 = por %p101, %p102
      %p104 = scmp.ne.s32.totalorder %s96, %s98
      %p105 = scmp.eq.s32.totalorder %s25, 1
      %p106 = por %p104, %p105
      %p107 = scmp.ne.s32.totalorder %s98, %s99
      %p108 = scmp.eq.s32.totalorder %s25, 0
      %p109 = por %p107, %p108
      %p110 = scmp.ne.s32.totalorder %s98, %s99
      %p111 = scmp.eq.s32.totalorder %s26, 1
      %p112 = por %p110, %p111
      %p114 = scmp.ne.s32.totalorder %s99, %s113
      %p115 = scmp.eq.s32.totalorder %s26, 0
      %p116 = por %p114, %p115
      %s118 = sadd.s32 %s117, 1
      %p121 = scmp.eq.s32.totalorder %s20, 1
      %p122 = scmp.ne.s32.totalorder %s117, %s119
      %p123 = scmp.eq.s32.totalorder %s20, 0
      %p124 = por %p122, %p123
      %p125 = scmp.ne.s32.totalorder %s117, %s119
      %p126 = scmp.eq.s32.totalorder %s25, 1
      %p127 = por %p125, %p126
      %p128 = scmp.ne.s32.totalorder %s119, %s120
      %p129 = scmp.eq.s32.totalorder %s25, 0
      %p130 = por %p128, %p129
      %p131 = scmp.ne.s32.totalorder %s119, %s120
      %p132 = scmp.eq.s32.totalorder %s26, 1
      %p133 = por %p131, %p132
      %p135 = scmp.ne.s32.totalorder %s120, %s134
      %p136 = scmp.eq.s32.totalorder %s26, 0
      %p137 = por %p135, %p136
      %s139 = sadd.s32 %s138, 1
      %p142 = scmp.eq.s32.totalorder %s20, 1
      %p143 = scmp.ne.s32.totalorder %s138, %s140
      %p144 = scmp.eq.s32.totalorder %s20, 0
      %p145 = por %p143, %p144
      %p146 = scmp.ne.s32.totalorder %s138, %s140
      %p147 = scmp.eq.s32.totalorder %s25, 1
      %p148 = por %p146, %p147
      %p149 = scmp.ne.s32.totalorder %s140, %s141
      %p150 = scmp.eq.s32.totalorder %s25, 0
      %p151 = por %p149, %p150
      %p152 = scmp.ne.s32.totalorder %s140, %s141
      %p153 = scmp.eq.s32.totalorder %s26, 1
      %p154 = por %p152, %p153
      %p156 = scmp.ne.s32.totalorder %s141, %s155
      %p157 = scmp.eq.s32.totalorder %s26, 0
      %p158 = por %p156, %p157
      %s160 = sadd.s32 %s159, 1
      %p163 = scmp.eq.s32.totalorder %s20, 1
      %p164 = scmp.ne.s32.totalorder %s159, %s161
      %p165 = scmp.eq.s32.totalorder %s20, 0
      %p166 = por %p164, %p165
      %p167 = scmp.ne.s32.totalorder %s159, %s161
      %p168 = scmp.eq.s32.totalorder %s25, 1
      %p169 = por %p167, %p168
      %p170 = scmp.ne.s32.totalorder %s161, %s162
      %p171 = scmp.eq.s32.totalorder %s25, 0
      %p172 = por %p170, %p171
      %p173 = scmp.ne.s32.totalorder %s161, %s162
      %p174 = scmp.eq.s32.totalorder %s26, 1
      %p175 = por %p173, %p174
      %p177 = scmp.ne.s32.totalorder %s162, %s176
      %p178 = scmp.eq.s32.totalorder %s26, 0
      %p179 = por %p177, %p178
      %s181 = sadd.s32 %s180, 1
      %p184 = scmp.eq.s32.totalorder %s20, 1
      %p185 = scmp.ne.s32.totalorder %s180, %s182
      %p186 = scmp.eq.s32.totalorder %s20, 0
      %p187 = por %p185, %p186
      %p188 = scmp.ne.s32.totalorder %s180, %s182
      %p189 = scmp.eq.s32.totalorder %s25, 1
      %p190 = por %p188, %p189
      %p191 = scmp.ne.s32.totalorder %s182, %s183
      %p192 = scmp.eq.s32.totalorder %s25, 0
      %p193 = por %p191, %p192
      %p194 = scmp.ne.s32.totalorder %s182, %s183
      %p195 = scmp.eq.s32.totalorder %s26, 1
      %p196 = por %p194, %p195
      %p198 = scmp.ne.s32.totalorder %s183, %s197
      %p199 = scmp.eq.s32.totalorder %s26, 0
      %p200 = por %p198, %p199
      %s201 = ssub.s32 %s20, %s27
      %p202 = scmp.eq.s32.totalorder %s201, 0
      %s204 = sadd.s32 %s203, 1
      %s205 = scalar_select %p202, %s203, %s204
      %p208 = pneg %p202
      %p209 = scmp.eq.s32.totalorder %s20, 1
      %p210 = por %p208, %p209
      %p211 = scmp.ne.s32.totalorder %s203, %s206
      %p212 = scmp.eq.s32.totalorder %s20, 0
      %p213 = por %p211, %p212
      %p214 = scmp.ne.s32.totalorder %s203, %s206
      %p215 = scmp.eq.s32.totalorder %s25, 1
      %p216 = por %p214, %p215
      %p217 = scmp.ne.s32.totalorder %s206, %s207
      %p218 = scmp.eq.s32.totalorder %s25, 0
      %p219 = por %p217, %p218
      %p220 = scmp.ne.s32.totalorder %s206, %s207
      %p221 = scmp.eq.s32.totalorder %s26, 1
      %p222 = por %p220, %p221
      %p224 = scmp.ne.s32.totalorder %s207, %s223
      %p225 = scmp.eq.s32.totalorder %s26, 0
      %p226 = por %p224, %p225
      %p227 = scmp.le.s32.totalorder 1, %s20
      %p228 = scmp.lt.s32.totalorder %s20, 3
      %p229 = pnand %p227, %p228
      %p230 = pneg %p229
      // Predicated region
      $region9: #{tpu_custom_call.1} parent=5 // pred_check
        _
      $region10: #{tpu_custom_call.1} parent=5 // pred_check_branch
        %232 = sbr.rel (%p229) target = $region12
      $region11: #{tpu_custom_call.1} parent=5 // pred_region
        %s233 = ssub.s32 %s20, 1
        // Predicated region
        $region13: #{tpu_custom_call.1} parent=11 // pred_check
          %p234 = pneg %p67
        $region14: #{tpu_custom_call.1} parent=11 // pred_check_branch
          %236 = sbr.rel (%p234) target = $region16
        $region15: #{tpu_custom_call.1} parent=11 // pred_region
          _
        $region16: #{tpu_custom_call.1} parent=11 // pred_fallthru
          _
        // Predicated region
        $region17: #{tpu_custom_call.1} parent=11 // pred_check
          %p237 = pneg %p88
        $region18: #{tpu_custom_call.1} parent=11 // pred_check_branch
          %239 = sbr.rel (%p237) target = $region20
        $region19: #{tpu_custom_call.1} parent=11 // pred_region
          _
        $region20: #{tpu_custom_call.1} parent=11 // pred_fallthru
          _
        // Predicated region
        $region21: #{tpu_custom_call.1} parent=11 // pred_check
          %p240 = pneg %p109
        $region22: #{tpu_custom_call.1} parent=11 // pred_check_branch
          %242 = sbr.rel (%p240) target = $region24
        $region23: #{tpu_custom_call.1} parent=11 // pred_region
          _
        $region24: #{tpu_custom_call.1} parent=11 // pred_fallthru
          _
        // Predicated region
        $region25: #{tpu_custom_call.1} parent=11 // pred_check
          %p243 = pneg %p130
        $region26: #{tpu_custom_call.1} parent=11 // pred_check_branch
          %245 = sbr.rel (%p243) target = $region28
        $region27: #{tpu_custom_call.1} parent=11 // pred_region
          _
        $region28: #{tpu_custom_call.1} parent=11 // pred_fallthru
          _
        // Predicated region
        $region29: #{tpu_custom_call.1} parent=11 // pred_check
          %p246 = pneg %p151
        $region30: #{tpu_custom_call.1} parent=11 // pred_check_branch
          %248 = sbr.rel (%p246) target = $region32
        $region31: #{tpu_custom_call.1} parent=11 // pred_region
          _
        $region32: #{tpu_custom_call.1} parent=11 // pred_fallthru
          _
        // Predicated region
        $region33: #{tpu_custom_call.1} parent=11 // pred_check
          %p249 = pneg %p172
        $region34: #{tpu_custom_call.1} parent=11 // pred_check_branch
          %251 = sbr.rel (%p249) target = $region36
        $region35: #{tpu_custom_call.1} parent=11 // pred_region
          _
        $region36: #{tpu_custom_call.1} parent=11 // pred_fallthru
          _
        // Predicated region
        $region37: #{tpu_custom_call.1} parent=11 // pred_check
          %p252 = pneg %p193
        $region38: #{tpu_custom_call.1} parent=11 // pred_check_branch
          %254 = sbr.rel (%p252) target = $region40
        $region39: #{tpu_custom_call.1} parent=11 // pred_region
          _
        $region40: #{tpu_custom_call.1} parent=11 // pred_fallthru
          _
      $region12: #{tpu_custom_call.1} parent=5 // pred_fallthru
        _
      %p255 = scmp.lt.s32.totalorder %s20, 2
      // Predicated region
      $region41: #{tpu_custom_call.1} parent=5 // pred_check
        %p256 = pneg %p255
      $region42: #{tpu_custom_call.1} parent=5 // pred_check_branch
        %258 = sbr.rel (%p256) target = $region44
      $region43: #{tpu_custom_call.1} parent=5 // pred_region
        // Predicated region
        $region45: #{tpu_custom_call.1} parent=43 // pred_check
          %p259 = pneg %p40
        $region46: #{tpu_custom_call.1} parent=43 // pred_check_branch
          %261 = sbr.rel (%p259) target = $region48
        $region47: #{tpu_custom_call.1} parent=43 // pred_region
          %s262 = sand.u32 %s30, 1
          %s263 = scalar_lea.sflag [#allocation3], %s262
          %s264 = sand.u32 %s30, 1
          %s265 = smul.addr %s264, 128
          %s266 = scalar_lea.vmem [#allocation2], %s265
          %s267 = smul.u32 8, %s20
          %s269 = ssub.s32 2048, 2048
          %270 = vsyncadd %s263, %s269
          %s271 = smul.addr %s267, 4
          %s272 = smul.addr %s271, 64
          %s273 = scalar_lea.hbm %s0, %s272
          %s274 = sshll.u32 %s266, 4
          %s275 = int_to_ptr.vmem [resolvable:$true] %s274
          %280 = dma.hbm_to_vmem [thread:$0]  %s273, 2048, %s275, %s263, 64, 64, 4
        $region48: #{tpu_custom_call.1} parent=43 // pred_fallthru
          _
      $region44: #{tpu_custom_call.1} parent=5 // pred_fallthru
        _
      %p281 = scmp.le.s32.totalorder 1, %s20
      %p282 = scmp.lt.s32.totalorder %s20, 3
      %p283 = pnand %p281, %p282
      %p284 = pneg %p283
      // Predicated region
      $region49: #{tpu_custom_call.1} parent=5 // pred_check
        _
      $region50: #{tpu_custom_call.1} parent=5 // pred_check_branch
        %286 = sbr.rel (%p283) target = $region52
      $region51: #{tpu_custom_call.1} parent=5 // pred_region
        %s287 = ssub.s32 %s20, 1
        %s288 = sand.u32 %s33, 1
        %s289 = scalar_lea.sflag [#allocation3], %s288
        %s290 = sand.u32 %s33, 1
        %s291 = smul.addr %s290, 128
        %s292 = scalar_lea.vmem [#allocation2], %s291
        // Predicated region
        $region53: #{tpu_custom_call.1} parent=51 // pred_check
          %p293 = pneg %p46
        $region54: #{tpu_custom_call.1} parent=51 // pred_check_branch
          %295 = sbr.rel (%p293) target = $region56
        $region55: #{tpu_custom_call.1} parent=51 // pred_region
          %296 = dma.done %s289, 2048
        $region56: #{tpu_custom_call.1} parent=51 // pred_fallthru
          _
        %s297 = sand.u32 %s33, 1
        %s298 = scalar_lea.sflag [#allocation3], %s297
        %s299 = sand.u32 %s33, 1
        %s300 = smul.addr %s299, 128
        %s301 = scalar_lea.vmem [#allocation2], %s300
        %p302 = pneg %p46
        %p303 = pneg %p43
        %p304 = pneg %p67
        %p305 = pneg %p64
        %p306 = pneg %p88
        %p307 = pneg %p85
        %p308 = pneg %p109
        %p309 = pneg %p106
        %p310 = pneg %p130
        %p311 = pneg %p127
        %p312 = pneg %p151
        %p313 = pneg %p148
        %p314 = pneg %p172
        %p315 = pneg %p169
        %p316 = pneg %p193
        %p317 = pneg %p190
        %p318 = pneg %p219
        %p319 = pneg %p216
        %s320 = sand.u32 %s206, 1
        %s321 = scalar_lea.sflag [#allocation4], %s320
        %s322 = sand.u32 %s206, 1
        %s323 = smul.addr %s322, 8
        %s324 = scalar_lea.vmem [#allocation5], %s323
        %s325 = smul.u32 8, %s25
        %v327 = vld [vmem:[%s6] sm:$0x1]
        %v328 = vld [vmem:[%s6 + $0x1] sm:$0x1]
        %v329 = vld [vmem:[%s6 + $0x2] sm:$0x1]
        %v330 = vld [vmem:[%s6 + $0x3] sm:$0x1]
        %v331 = vld [vmem:[%s6 + $0x4] sm:$0x1]
        %v332 = vld [vmem:[%s292] sm:$0xf]
        %v333 = vld [vmem:[%s292 + $0x4] sm:$0xf]
        %v334 = vld [vmem:[%s292 + $0x8] sm:$0xf]
        %v335 = vld [vmem:[%s292 + $0xc] sm:$0xf]
        %v336 = vld [vmem:[%s292 + $0x10] sm:$0xf]
        %v337 = vld [vmem:[%s292 + $0x14] sm:$0xf]
        %v338 = vld [vmem:[%s292 + $0x18] sm:$0xf]
        %v339 = vld [vmem:[%s292 + $0x1c] sm:$0xf]
        %v340 = vld [vmem:[%s292 + $0x20] sm:$0xf]
        %v341 = vld [vmem:[%s292 + $0x24] sm:$0xf]
        %v342 = vld [vmem:[%s292 + $0x28] sm:$0xf]
        %v343 = vld [vmem:[%s292 + $0x2c] sm:$0xf]
        %v344 = vld [vmem:[%s292 + $0x30] sm:$0xf]
        %v345 = vld [vmem:[%s292 + $0x34] sm:$0xf]
        %v346 = vld [vmem:[%s292 + $0x38] sm:$0xf]
        %v347 = vld [vmem:[%s292 + $0x3c] sm:$0xf]
        %v348 = vld [vmem:[%s292 + $0x40] sm:$0xf]
        %v349 = vld [vmem:[%s292 + $0x44] sm:$0xf]
        %v350 = vld [vmem:[%s292 + $0x48] sm:$0xf]
        %v351 = vld [vmem:[%s292 + $0x4c] sm:$0xf]
        %v352 = vld [vmem:[%s292 + $0x50] sm:$0xf]
        %v353 = vld [vmem:[%s292 + $0x54] sm:$0xf]
        %v354 = vld [vmem:[%s292 + $0x58] sm:$0xf]
        %v355 = vld [vmem:[%s292 + $0x5c] sm:$0xf]
        %v356 = vld [vmem:[%s292 + $0x60] sm:$0xf]
        %v357 = vld [vmem:[%s292 + $0x64] sm:$0xf]
        %v358 = vld [vmem:[%s292 + $0x68] sm:$0xf]
        %v359 = vld [vmem:[%s292 + $0x6c] sm:$0xf]
        %v360 = vld [vmem:[%s292 + $0x70] sm:$0xf]
        %v361 = vld [vmem:[%s292 + $0x74] sm:$0xf]
        %v362 = vld [vmem:[%s292 + $0x78] sm:$0xf]
        %v363 = vld [vmem:[%s292 + $0x7c] sm:$0xf]
        %v364 = vld [vmem:[%s1] sm:$0xf]
        %v365 = vld [vmem:[%s1 + $0x4] sm:$0xf]
        %v366 = vld [vmem:[%s1 + $0x8] sm:$0xf]
        %v367 = vld [vmem:[%s1 + $0xc] sm:$0xf]
        %v368 = vld [vmem:[%s1 + $0x10] sm:$0xf]
        %v369 = vld [vmem:[%s1 + $0x14] sm:$0xf]
        %v370 = vld [vmem:[%s1 + $0x18] sm:$0xf]
        %v371 = vld [vmem:[%s1 + $0x1c] sm:$0xf]
        %v372 = vlaneseq
        %v373 = vshrl.u32 %v372, 7
        %v374 = vsub.s32 0, %v373
        %v375 = vrot.slane %v327, %v374
        %v408 = vunpack.c.l.b16 %v332
        %v409 = vunpack.c.l.b16 %v333
        %v410 = vunpack.c.l.b16 %v334
        %v411 = vunpack.c.l.b16 %v335
        %v412 = vunpack.c.l.b16 %v336
        %v413 = vunpack.c.l.b16 %v337
        %v414 = vunpack.c.l.b16 %v338
        %v415 = vunpack.c.l.b16 %v339
        %v416 = vunpack.c.l.b16 %v340
        %v417 = vunpack.c.l.b16 %v341
        %v418 = vunpack.c.l.b16 %v342
        %v419 = vunpack.c.l.b16 %v343
        %v420 = vunpack.c.l.b16 %v344
        %v421 = vunpack.c.l.b16 %v345
        %v422 = vunpack.c.l.b16 %v346
        %v423 = vunpack.c.l.b16 %v347
        %v424 = vunpack.c.l.b16 %v348
        %v425 = vunpack.c.l.b16 %v349
        %v426 = vunpack.c.l.b16 %v350
        %v427 = vunpack.c.l.b16 %v351
        %v428 = vunpack.c.l.b16 %v352
        %v429 = vunpack.c.l.b16 %v353
        %v430 = vunpack.c.l.b16 %v354
        %v431 = vunpack.c.l.b16 %v355
        %v432 = vunpack.c.l.b16 %v356
        %v433 = vunpack.c.l.b16 %v357
        %v434 = vunpack.c.l.b16 %v358
        %v435 = vunpack.c.l.b16 %v359
        %v436 = vunpack.c.l.b16 %v360
        %v437 = vunpack.c.l.b16 %v361
        %v438 = vunpack.c.l.b16 %v362
        %v439 = vunpack.c.l.b16 %v363
        %v440 = vpack.c.b16 %v409, %v408
        %v441 = vpack.c.b16 %v411, %v410
        %v442 = vpack.c.b16 %v413, %v412
        %v443 = vpack.c.b16 %v415, %v414
        %v444 = vpack.c.b16 %v417, %v416
        %v445 = vpack.c.b16 %v419, %v418
        %v446 = vpack.c.b16 %v421, %v420
        %v447 = vpack.c.b16 %v423, %v422
        %v448 = vpack.c.b16 %v425, %v424
        %v449 = vpack.c.b16 %v427, %v426
        %v450 = vpack.c.b16 %v429, %v428
        %v451 = vpack.c.b16 %v431, %v430
        %v452 = vpack.c.b16 %v433, %v432
        %v453 = vpack.c.b16 %v435, %v434
        %v454 = vpack.c.b16 %v437, %v436
        %v455 = vpack.c.b16 %v439, %v438
        %v464 = vunpack.c.l.b16 %v364
        %v465 = vunpack.c.l.b16 %v365
        %v466 = vunpack.c.l.b16 %v366
        %v467 = vunpack.c.l.b16 %v367
        %v468 = vunpack.c.l.b16 %v368
        %v469 = vunpack.c.l.b16 %v369
        %v470 = vunpack.c.l.b16 %v370
        %v471 = vunpack.c.l.b16 %v371
        %v472 = vpack.c.b16 %v465, %v464
        %v473 = vpack.c.b16 %v467, %v466
        %v474 = vpack.c.b16 %v469, %v468
        %v475 = vpack.c.b16 %v471, %v470
        %vm480 = vcmask 523264
        %v482 = vsel %vm480, %v440, 0
        %v485 = vsel %vm480, %v441, 0
        %v488 = vsel %vm480, %v442, 0
        %v491 = vsel %vm480, %v443, 0
        %v494 = vsel %vm480, %v444, 0
        %v497 = vsel %vm480, %v445, 0
        %v500 = vsel %vm480, %v446, 0
        %v503 = vsel %vm480, %v447, 0
        %v506 = vsel %vm480, %v448, 0
        %v509 = vsel %vm480, %v449, 0
        %v512 = vsel %vm480, %v450, 0
        %v515 = vsel %vm480, %v451, 0
        %v518 = vsel %vm480, %v452, 0
        %v521 = vsel %vm480, %v453, 0
        %v524 = vsel %vm480, %v454, 0
        %v527 = vsel %vm480, %v455, 0
        %529 = vmatprep.subr.bf16.mxu0 0
        %530 = vmatpush1.bf16.msra.mxu0 0
        %531 = vmatprep.subr.bf16.mxu0 0
        %532 = vmatpush1.bf16.msra.mxu0 0
        %533 = vmatprep.subr.bf16.mxu0 0
        %534 = vmatpush1.bf16.msra.mxu0 0
        %535 = vmatprep.subr.bf16.mxu0 0
        %536 = vmatpush1.bf16.msra.mxu0 0
        %537 = vmatprep.subr.bf16.mxu0 0
        %538 = vmatpush1.bf16.msra.mxu0 %v475
        %539 = vmatprep.subr.bf16.mxu0 0
        %540 = vmatpush1.bf16.msra.mxu0 %v474
        %541 = vmatprep.subr.bf16.mxu0 0
        %542 = vmatpush1.bf16.msra.mxu0 %v473
        %543 = vmatprep.subr.bf16.mxu0 0
        %544 = vmatpush1.bf16.msra.mxu0 %v472
        %545 = vmatprep.subr.bf16.mxu0 0
        %546 = vmatpush2.bf16.msra.mxu0 0
        %547 = vmatprep.subr.bf16.mxu0 0
        %548 = vmatpush2.bf16.msra.mxu0 0
        %549 = vmatprep.subr.bf16.mxu0 0
        %550 = vmatpush2.bf16.msra.mxu0 0
        %551 = vmatprep.subr.bf16.mxu0 0
        %552 = vmatpush2.bf16.msra.mxu0 0
        %553 = vmatprep.subr.bf16.mxu0 0
        %554 = vmatpush2.bf16.msra.mxu0 0
        %555 = vmatprep.subr.bf16.mxu0 0
        %556 = vmatpush2.bf16.msra.mxu0 0
        %557 = vmatprep.subr.bf16.mxu0 0
        %558 = vmatpush2.bf16.msra.mxu0 0
        %559 = vmatprep.subr.bf16.mxu0 0
        %560 = vmatpush2.bf16.msra.mxu0 0
        %561 = vmatprep.mubr.bf16.mxu0 0
        %562 = vmatmul.mubr.bf16.gmra.mxu0 %v482
        %v563 = vpop.f32.mrf.mxu0
        %v564 = vadd.f32 %v375, %v563
        %v565 = vpop.f32.mrf.mxu0
        %v566 = vpop.f32.mrf.mxu0
        %v567 = vadd.f32 %v375, %v566
        %v568 = vpop.f32.mrf.mxu0
        %569 = vmatprep.mubr.bf16.mxu0 0
        %570 = vmatmul.mubr.bf16.gmra.mxu0 %v485
        %v571 = vpop.f32.mrf.mxu0
        %v572 = vadd.f32 %v375, %v571
        %v573 = vpop.f32.mrf.mxu0
        %v574 = vpop.f32.mrf.mxu0
        %v575 = vadd.f32 %v375, %v574
        %v576 = vpop.f32.mrf.mxu0
        %577 = vmatprep.mubr.bf16.mxu0 0
        %578 = vmatmul.mubr.bf16.gmra.mxu0 %v488
        %v579 = vpop.f32.mrf.mxu0
        %v580 = vadd.f32 %v375, %v579
        %v581 = vpop.f32.mrf.mxu0
        %v582 = vpop.f32.mrf.mxu0
        %v583 = vadd.f32 %v375, %v582
        %v584 = vpop.f32.mrf.mxu0
        %585 = vmatprep.mubr.bf16.mxu0 0
        %586 = vmatmul.mubr.bf16.gmra.mxu0 %v491
        %v587 = vpop.f32.mrf.mxu0
        %v588 = vadd.f32 %v375, %v587
        %v589 = vpop.f32.mrf.mxu0
        %v590 = vpop.f32.mrf.mxu0
        %v591 = vadd.f32 %v375, %v590
        %v592 = vpop.f32.mrf.mxu0
        %593 = vmatprep.mubr.bf16.mxu0 0
        %594 = vmatmul.mubr.bf16.gmra.mxu0 %v494
        %v595 = vpop.f32.mrf.mxu0
        %v596 = vadd.f32 %v375, %v595
        %v597 = vpop.f32.mrf.mxu0
        %v598 = vpop.f32.mrf.mxu0
        %v599 = vadd.f32 %v375, %v598
        %v600 = vpop.f32.mrf.mxu0
        %601 = vmatprep.mubr.bf16.mxu0 0
        %602 = vmatmul.mubr.bf16.gmra.mxu0 %v497
        %v603 = vpop.f32.mrf.mxu0
        %v604 = vadd.f32 %v375, %v603
        %v605 = vpop.f32.mrf.mxu0
        %v606 = vpop.f32.mrf.mxu0
        %v607 = vadd.f32 %v375, %v606
        %v608 = vpop.f32.mrf.mxu0
        %609 = vmatprep.mubr.bf16.mxu0 0
        %610 = vmatmul.mubr.bf16.gmra.mxu0 %v500
        %v611 = vpop.f32.mrf.mxu0
        %v612 = vadd.f32 %v375, %v611
        %v613 = vpop.f32.mrf.mxu0
        %v614 = vpop.f32.mrf.mxu0
        %v615 = vadd.f32 %v375, %v614
        %v616 = vpop.f32.mrf.mxu0
        %617 = vmatprep.mubr.bf16.mxu0 0
        %618 = vmatmul.mubr.bf16.gmra.mxu0 %v503
        %v619 = vpop.f32.mrf.mxu0
        %v620 = vadd.f32 %v375, %v619
        %v621 = vpop.f32.mrf.mxu0
        %v622 = vpop.f32.mrf.mxu0
        %v623 = vadd.f32 %v375, %v622
        %v624 = vpop.f32.mrf.mxu0
        %625 = vmatprep.mubr.bf16.mxu0 0
        %626 = vmatmul.mubr.bf16.gmra.mxu0 %v506
        %v627 = vpop.f32.mrf.mxu0
        %v628 = vadd.f32 %v375, %v627
        %v629 = vpop.f32.mrf.mxu0
        %v630 = vpop.f32.mrf.mxu0
        %v631 = vadd.f32 %v375, %v630
        %v632 = vpop.f32.mrf.mxu0
        %633 = vmatprep.mubr.bf16.mxu0 0
        %634 = vmatmul.mubr.bf16.gmra.mxu0 %v509
        %v635 = vpop.f32.mrf.mxu0
        %v636 = vadd.f32 %v375, %v635
        %v637 = vpop.f32.mrf.mxu0
        %v638 = vpop.f32.mrf.mxu0
        %v639 = vadd.f32 %v375, %v638
        %v640 = vpop.f32.mrf.mxu0
        %641 = vmatprep.mubr.bf16.mxu0 0
        %642 = vmatmul.mubr.bf16.gmra.mxu0 %v512
        %v643 = vpop.f32.mrf.mxu0
        %v644 = vadd.f32 %v375, %v643
        %v645 = vpop.f32.mrf.mxu0
        %v646 = vpop.f32.mrf.mxu0
        %v647 = vadd.f32 %v375, %v646
        %v648 = vpop.f32.mrf.mxu0
        %649 = vmatprep.mubr.bf16.mxu0 0
        %650 = vmatmul.mubr.bf16.gmra.mxu0 %v515
        %v651 = vpop.f32.mrf.mxu0
        %v652 = vadd.f32 %v375, %v651
        %v653 = vpop.f32.mrf.mxu0
        %v654 = vpop.f32.mrf.mxu0
        %v655 = vadd.f32 %v375, %v654
        %v656 = vpop.f32.mrf.mxu0
        %657 = vmatprep.mubr.bf16.mxu0 0
        %658 = vmatmul.mubr.bf16.gmra.mxu0 %v518
        %v659 = vpop.f32.mrf.mxu0
        %v660 = vadd.f32 %v375, %v659
        %v661 = vpop.f32.mrf.mxu0
        %v662 = vpop.f32.mrf.mxu0
        %v663 = vadd.f32 %v375, %v662
        %v664 = vpop.f32.mrf.mxu0
        %665 = vmatprep.mubr.bf16.mxu0 0
        %666 = vmatmul.mubr.bf16.gmra.mxu0 %v521
        %v667 = vpop.f32.mrf.mxu0
        %v668 = vadd.f32 %v375, %v667
        %v669 = vpop.f32.mrf.mxu0
        %v670 = vpop.f32.mrf.mxu0
        %v671 = vadd.f32 %v375, %v670
        %v672 = vpop.f32.mrf.mxu0
        %673 = vmatprep.mubr.bf16.mxu0 0
        %674 = vmatmul.mubr.bf16.gmra.mxu0 %v524
        %v675 = vpop.f32.mrf.mxu0
        %v676 = vadd.f32 %v375, %v675
        %v677 = vpop.f32.mrf.mxu0
        %v678 = vpop.f32.mrf.mxu0
        %v679 = vadd.f32 %v375, %v678
        %v680 = vpop.f32.mrf.mxu0
        %681 = vmatprep.mubr.bf16.mxu0 0
        %682 = vmatmul.mubr.bf16.gmra.mxu0 %v527
        %v683 = vpop.f32.mrf.mxu0
        %v684 = vadd.f32 %v375, %v683
        %v685 = vpop.f32.mrf.mxu0
        %v686 = vpop.f32.mrf.mxu0
        %v687 = vadd.f32 %v375, %v686
        %v688 = vpop.f32.mrf.mxu0
        %689 = vdwg.mxu0
        %v690 = vmax.f32 %v564, 0.0
        %v691 = vmax.f32 %v567, 0.0
        %v692 = vmax.f32 %v572, 0.0
        %v693 = vmax.f32 %v575, 0.0
        %v694 = vmax.f32 %v580, 0.0
        %v695 = vmax.f32 %v583, 0.0
        %v696 = vmax.f32 %v588, 0.0
        %v697 = vmax.f32 %v591, 0.0
        %v698 = vmax.f32 %v596, 0.0
        %v699 = vmax.f32 %v599, 0.0
        %v700 = vmax.f32 %v604, 0.0
        %v701 = vmax.f32 %v607, 0.0
        %v702 = vmax.f32 %v612, 0.0
        %v703 = vmax.f32 %v615, 0.0
        %v704 = vmax.f32 %v620, 0.0
        %v705 = vmax.f32 %v623, 0.0
        %v706 = vmax.f32 %v628, 0.0
        %v707 = vmax.f32 %v631, 0.0
        %v708 = vmax.f32 %v636, 0.0
        %v709 = vmax.f32 %v639, 0.0
        %v710 = vmax.f32 %v644, 0.0
        %v711 = vmax.f32 %v647, 0.0
        %v712 = vmax.f32 %v652, 0.0
        %v713 = vmax.f32 %v655, 0.0
        %v714 = vmax.f32 %v660, 0.0
        %v715 = vmax.f32 %v663, 0.0
        %v716 = vmax.f32 %v668, 0.0
        %v717 = vmax.f32 %v671, 0.0
        %v718 = vmax.f32 %v676, 0.0
        %v719 = vmax.f32 %v679, 0.0
        %v720 = vmax.f32 %v684, 0.0
        %v721 = vmax.f32 %v687, 0.0
        %v722 = vlaneseq
        %v723 = vshrl.u32 %v722, 7
        %v724 = vsub.s32 0, %v723
        %v725 = vrot.slane %v328, %v724
        %v726 = vmul.f32 %v690, %v725
        %v727 = vmul.f32 %v691, %v725
        %v728 = vmul.f32 %v692, %v725
        %v729 = vmul.f32 %v693, %v725
        %v730 = vmul.f32 %v694, %v725
        %v731 = vmul.f32 %v695, %v725
        %v732 = vmul.f32 %v696, %v725
        %v733 = vmul.f32 %v697, %v725
        %v734 = vmul.f32 %v698, %v725
        %v735 = vmul.f32 %v699, %v725
        %v736 = vmul.f32 %v700, %v725
        %v737 = vmul.f32 %v701, %v725
        %v738 = vmul.f32 %v702, %v725
        %v739 = vmul.f32 %v703, %v725
        %v740 = vmul.f32 %v704, %v725
        %v741 = vmul.f32 %v705, %v725
        %v742 = vmul.f32 %v706, %v725
        %v743 = vmul.f32 %v707, %v725
        %v744 = vmul.f32 %v708, %v725
        %v745 = vmul.f32 %v709, %v725
        %v746 = vmul.f32 %v710, %v725
        %v747 = vmul.f32 %v711, %v725
        %v748 = vmul.f32 %v712, %v725
        %v749 = vmul.f32 %v713, %v725
        %v750 = vmul.f32 %v714, %v725
        %v751 = vmul.f32 %v715, %v725
        %v752 = vmul.f32 %v716, %v725
        %v753 = vmul.f32 %v717, %v725
        %v754 = vmul.f32 %v718, %v725
        %v755 = vmul.f32 %v719, %v725
        %v756 = vmul.f32 %v720, %v725
        %v757 = vmul.f32 %v721, %v725
        %v758 = vlaneseq
        %v759 = vshrl.u32 %v758, 7
        %v760 = vsub.s32 0, %v759
        %v761 = vrot.slane %v329, %v760
        %v762 = vadd.f32 %v726, %v761
        %v763 = vadd.f32 %v727, %v761
        %v764 = vadd.f32 %v728, %v761
        %v765 = vadd.f32 %v729, %v761
        %v766 = vadd.f32 %v730, %v761
        %v767 = vadd.f32 %v731, %v761
        %v768 = vadd.f32 %v732, %v761
        %v769 = vadd.f32 %v733, %v761
        %v770 = vadd.f32 %v734, %v761
        %v771 = vadd.f32 %v735, %v761
        %v772 = vadd.f32 %v736, %v761
        %v773 = vadd.f32 %v737, %v761
        %v774 = vadd.f32 %v738, %v761
        %v775 = vadd.f32 %v739, %v761
        %v776 = vadd.f32 %v740, %v761
        %v777 = vadd.f32 %v741, %v761
        %v778 = vadd.f32 %v742, %v761
        %v779 = vadd.f32 %v743, %v761
        %v780 = vadd.f32 %v744, %v761
        %v781 = vadd.f32 %v745, %v761
        %v782 = vadd.f32 %v746, %v761
        %v783 = vadd.f32 %v747, %v761
        %v784 = vadd.f32 %v748, %v761
        %v785 = vadd.f32 %v749, %v761
        %v786 = vadd.f32 %v750, %v761
        %v787 = vadd.f32 %v751, %v761
        %v788 = vadd.f32 %v752, %v761
        %v789 = vadd.f32 %v753, %v761
        %v790 = vadd.f32 %v754, %v761
        %v791 = vadd.f32 %v755, %v761
        %v792 = vadd.f32 %v756, %v761
        %v793 = vadd.f32 %v757, %v761
        %v794 = vpack.c.bf16 %v763, %v762
        %v795 = vpack.c.bf16 %v765, %v764
        %v796 = vpack.c.bf16 %v767, %v766
        %v797 = vpack.c.bf16 %v769, %v768
        %v798 = vpack.c.bf16 %v771, %v770
        %v799 = vpack.c.bf16 %v773, %v772
        %v800 = vpack.c.bf16 %v775, %v774
        %v801 = vpack.c.bf16 %v777, %v776
        %v802 = vpack.c.bf16 %v779, %v778
        %v803 = vpack.c.bf16 %v781, %v780
        %v804 = vpack.c.bf16 %v783, %v782
        %v805 = vpack.c.bf16 %v785, %v784
        %v806 = vpack.c.bf16 %v787, %v786
        %v807 = vpack.c.bf16 %v789, %v788
        %v808 = vpack.c.bf16 %v791, %v790
        %v809 = vpack.c.bf16 %v793, %v792
        %v810 = vld [vmem:[%s2] sm:$0xf]
        %v811 = vld [vmem:[%s2 + $0x4] sm:$0xf]
        %v812 = vld [vmem:[%s2 + $0x8] sm:$0xf]
        %v813 = vld [vmem:[%s2 + $0xc] sm:$0xf]
        %v818 = vunpack.c.l.b16 %v810
        %v819 = vunpack.c.l.b16 %v811
        %v820 = vunpack.c.l.b16 %v812
        %v821 = vunpack.c.l.b16 %v813
        %v822 = vpack.c.b16 %v819, %v818
        %v823 = vpack.c.b16 %v821, %v820
        %vm826 = vcmask 261120
        %v828 = vsel %vm826, %v794, 0
        %v831 = vsel %vm826, %v795, 0
        %v834 = vsel %vm826, %v796, 0
        %v837 = vsel %vm826, %v797, 0
        %v840 = vsel %vm826, %v798, 0
        %v843 = vsel %vm826, %v799, 0
        %v846 = vsel %vm826, %v800, 0
        %v849 = vsel %vm826, %v801, 0
        %v852 = vsel %vm826, %v802, 0
        %v855 = vsel %vm826, %v803, 0
        %v858 = vsel %vm826, %v804, 0
        %v861 = vsel %vm826, %v805, 0
        %v864 = vsel %vm826, %v806, 0
        %v867 = vsel %vm826, %v807, 0
        %v870 = vsel %vm826, %v808, 0
        %v873 = vsel %vm826, %v809, 0
        %875 = vmatprep.subr.bf16.mxu0 0
        %876 = vmatpush1.bf16.msra.mxu0 0
        %877 = vmatprep.subr.bf16.mxu0 0
        %878 = vmatpush1.bf16.msra.mxu0 0
        %879 = vmatprep.subr.bf16.mxu0 0
        %880 = vmatpush1.bf16.msra.mxu0 0
        %881 = vmatprep.subr.bf16.mxu0 0
        %882 = vmatpush1.bf16.msra.mxu0 0
        %883 = vmatprep.subr.bf16.mxu0 0
        %884 = vmatpush1.bf16.msra.mxu0 0
        %885 = vmatprep.subr.bf16.mxu0 0
        %886 = vmatpush1.bf16.msra.mxu0 0
        %887 = vmatprep.subr.bf16.mxu0 0
        %888 = vmatpush1.bf16.msra.mxu0 %v823
        %889 = vmatprep.subr.bf16.mxu0 0
        %890 = vmatpush1.bf16.msra.mxu0 %v822
        %891 = vmatprep.subr.bf16.mxu0 0
        %892 = vmatpush2.bf16.msra.mxu0 0
        %893 = vmatprep.subr.bf16.mxu0 0
        %894 = vmatpush2.bf16.msra.mxu0 0
        %895 = vmatprep.subr.bf16.mxu0 0
        %896 = vmatpush2.bf16.msra.mxu0 0
        %897 = vmatprep.subr.bf16.mxu0 0
        %898 = vmatpush2.bf16.msra.mxu0 0
        %899 = vmatprep.subr.bf16.mxu0 0
        %900 = vmatpush2.bf16.msra.mxu0 0
        %901 = vmatprep.subr.bf16.mxu0 0
        %902 = vmatpush2.bf16.msra.mxu0 0
        %903 = vmatprep.subr.bf16.mxu0 0
        %904 = vmatpush2.bf16.msra.mxu0 0
        %905 = vmatprep.subr.bf16.mxu0 0
        %906 = vmatpush2.bf16.msra.mxu0 0
        %907 = vmatprep.mubr.bf16.mxu0 0
        %908 = vmatmul.mubr.bf16.gmra.mxu0 %v828
        %v909 = vpop.f32.mrf.mxu0
        %v910 = vadd.f32 0.0, %v909
        %v911 = vpop.f32.mrf.mxu0
        %v912 = vpop.f32.mrf.mxu0
        %v913 = vadd.f32 0.0, %v912
        %v914 = vpop.f32.mrf.mxu0
        %915 = vmatprep.mubr.bf16.mxu0 0
        %916 = vmatmul.mubr.bf16.gmra.mxu0 %v831
        %v917 = vpop.f32.mrf.mxu0
        %v918 = vadd.f32 0.0, %v917
        %v919 = vpop.f32.mrf.mxu0
        %v920 = vpop.f32.mrf.mxu0
        %v921 = vadd.f32 0.0, %v920
        %v922 = vpop.f32.mrf.mxu0
        %923 = vmatprep.mubr.bf16.mxu0 0
        %924 = vmatmul.mubr.bf16.gmra.mxu0 %v834
        %v925 = vpop.f32.mrf.mxu0
        %v926 = vadd.f32 0.0, %v925
        %v927 = vpop.f32.mrf.mxu0
        %v928 = vpop.f32.mrf.mxu0
        %v929 = vadd.f32 0.0, %v928
        %v930 = vpop.f32.mrf.mxu0
        %931 = vmatprep.mubr.bf16.mxu0 0
        %932 = vmatmul.mubr.bf16.gmra.mxu0 %v837
        %v933 = vpop.f32.mrf.mxu0
        %v934 = vadd.f32 0.0, %v933
        %v935 = vpop.f32.mrf.mxu0
        %v936 = vpop.f32.mrf.mxu0
        %v937 = vadd.f32 0.0, %v936
        %v938 = vpop.f32.mrf.mxu0
        %939 = vmatprep.mubr.bf16.mxu0 0
        %940 = vmatmul.mubr.bf16.gmra.mxu0 %v840
        %v941 = vpop.f32.mrf.mxu0
        %v942 = vadd.f32 0.0, %v941
        %v943 = vpop.f32.mrf.mxu0
        %v944 = vpop.f32.mrf.mxu0
        %v945 = vadd.f32 0.0, %v944
        %v946 = vpop.f32.mrf.mxu0
        %947 = vmatprep.mubr.bf16.mxu0 0
        %948 = vmatmul.mubr.bf16.gmra.mxu0 %v843
        %v949 = vpop.f32.mrf.mxu0
        %v950 = vadd.f32 0.0, %v949
        %v951 = vpop.f32.mrf.mxu0
        %v952 = vpop.f32.mrf.mxu0
        %v953 = vadd.f32 0.0, %v952
        %v954 = vpop.f32.mrf.mxu0
        %955 = vmatprep.mubr.bf16.mxu0 0
        %956 = vmatmul.mubr.bf16.gmra.mxu0 %v846
        %v957 = vpop.f32.mrf.mxu0
        %v958 = vadd.f32 0.0, %v957
        %v959 = vpop.f32.mrf.mxu0
        %v960 = vpop.f32.mrf.mxu0
        %v961 = vadd.f32 0.0, %v960
        %v962 = vpop.f32.mrf.mxu0
        %963 = vmatprep.mubr.bf16.mxu0 0
        %964 = vmatmul.mubr.bf16.gmra.mxu0 %v849
        %v965 = vpop.f32.mrf.mxu0
        %v966 = vadd.f32 0.0, %v965
        %v967 = vpop.f32.mrf.mxu0
        %v968 = vpop.f32.mrf.mxu0
        %v969 = vadd.f32 0.0, %v968
        %v970 = vpop.f32.mrf.mxu0
        %971 = vmatprep.mubr.bf16.mxu0 0
        %972 = vmatmul.mubr.bf16.gmra.mxu0 %v852
        %v973 = vpop.f32.mrf.mxu0
        %v974 = vadd.f32 0.0, %v973
        %v975 = vpop.f32.mrf.mxu0
        %v976 = vpop.f32.mrf.mxu0
        %v977 = vadd.f32 0.0, %v976
        %v978 = vpop.f32.mrf.mxu0
        %979 = vmatprep.mubr.bf16.mxu0 0
        %980 = vmatmul.mubr.bf16.gmra.mxu0 %v855
        %v981 = vpop.f32.mrf.mxu0
        %v982 = vadd.f32 0.0, %v981
        %v983 = vpop.f32.mrf.mxu0
        %v984 = vpop.f32.mrf.mxu0
        %v985 = vadd.f32 0.0, %v984
        %v986 = vpop.f32.mrf.mxu0
        %987 = vmatprep.mubr.bf16.mxu0 0
        %988 = vmatmul.mubr.bf16.gmra.mxu0 %v858
        %v989 = vpop.f32.mrf.mxu0
        %v990 = vadd.f32 0.0, %v989
        %v991 = vpop.f32.mrf.mxu0
        %v992 = vpop.f32.mrf.mxu0
        %v993 = vadd.f32 0.0, %v992
        %v994 = vpop.f32.mrf.mxu0
        %995 = vmatprep.mubr.bf16.mxu0 0
        %996 = vmatmul.mubr.bf16.gmra.mxu0 %v861
        %v997 = vpop.f32.mrf.mxu0
        %v998 = vadd.f32 0.0, %v997
        %v999 = vpop.f32.mrf.mxu0
        %v1000 = vpop.f32.mrf.mxu0
        %v1001 = vadd.f32 0.0, %v1000
        %v1002 = vpop.f32.mrf.mxu0
        %1003 = vmatprep.mubr.bf16.mxu0 0
        %1004 = vmatmul.mubr.bf16.gmra.mxu0 %v864
        %v1005 = vpop.f32.mrf.mxu0
        %v1006 = vadd.f32 0.0, %v1005
        %v1007 = vpop.f32.mrf.mxu0
        %v1008 = vpop.f32.mrf.mxu0
        %v1009 = vadd.f32 0.0, %v1008
        %v1010 = vpop.f32.mrf.mxu0
        %1011 = vmatprep.mubr.bf16.mxu0 0
        %1012 = vmatmul.mubr.bf16.gmra.mxu0 %v867
        %v1013 = vpop.f32.mrf.mxu0
        %v1014 = vadd.f32 0.0, %v1013
        %v1015 = vpop.f32.mrf.mxu0
        %v1016 = vpop.f32.mrf.mxu0
        %v1017 = vadd.f32 0.0, %v1016
        %v1018 = vpop.f32.mrf.mxu0
        %1019 = vmatprep.mubr.bf16.mxu0 0
        %1020 = vmatmul.mubr.bf16.gmra.mxu0 %v870
        %v1021 = vpop.f32.mrf.mxu0
        %v1022 = vadd.f32 0.0, %v1021
        %v1023 = vpop.f32.mrf.mxu0
        %v1024 = vpop.f32.mrf.mxu0
        %v1025 = vadd.f32 0.0, %v1024
        %v1026 = vpop.f32.mrf.mxu0
        %1027 = vmatprep.mubr.bf16.mxu0 0
        %1028 = vmatmul.mubr.bf16.gmra.mxu0 %v873
        %v1029 = vpop.f32.mrf.mxu0
        %v1030 = vadd.f32 0.0, %v1029
        %v1031 = vpop.f32.mrf.mxu0
        %v1032 = vpop.f32.mrf.mxu0
        %v1033 = vadd.f32 0.0, %v1032
        %v1034 = vpop.f32.mrf.mxu0
        %1035 = vdwg.mxu0
        %v1036 = vlaneseq
        %v1037 = vshrl.u32 %v1036, 7
        %v1038 = vadd.s32 %v1037, 8
        %v1039 = vadd.s32 %v1037, 16
        %v1040 = vadd.s32 %v1037, 24
        %vm1041 = vcmask 269568
        %v1042 = vsel %vm1041, %v910, -inf
        %v1043 = vsel %vm1041, %v913, -inf
        %v1044 = vmax.f32 %v1042, %v1043
        %v1045 = vsel %vm1041, %v918, -inf
        %v1046 = vmax.f32 %v1044, %v1045
        %v1047 = vsel %vm1041, %v921, -inf
        %v1048 = vmax.f32 %v1046, %v1047
        %v1049 = vrot.slane %v1048, 4
        %v1050 = vmax.f32 %v1048, %v1049
        %v1051 = vrot.slane %v1050, 2
        %v1052 = vmax.f32 %v1050, %v1051
        %v1053 = vrot.slane %v1052, 1
        %v1054 = vmax.f32 %v1052, %v1053
        %v1055 = vsel %vm1041, %v926, -inf
        %v1056 = vsel %vm1041, %v929, -inf
        %v1057 = vmax.f32 %v1055, %v1056
        %v1058 = vsel %vm1041, %v934, -inf
        %v1059 = vmax.f32 %v1057, %v1058
        %v1060 = vsel %vm1041, %v937, -inf
        %v1061 = vmax.f32 %v1059, %v1060
        %v1062 = vrot.slane %v1061, 4
        %v1063 = vmax.f32 %v1061, %v1062
        %v1064 = vrot.slane %v1063, 2
        %v1065 = vmax.f32 %v1063, %v1064
        %v1066 = vrot.slane %v1065, 1
        %v1067 = vmax.f32 %v1065, %v1066
        %v1068 = vsel %vm1041, %v942, -inf
        %v1069 = vsel %vm1041, %v945, -inf
        %v1070 = vmax.f32 %v1068, %v1069
        %v1071 = vsel %vm1041, %v950, -inf
        %v1072 = vmax.f32 %v1070, %v1071
        %v1073 = vsel %vm1041, %v953, -inf
        %v1074 = vmax.f32 %v1072, %v1073
        %v1075 = vrot.slane %v1074, 4
        %v1076 = vmax.f32 %v1074, %v1075
        %v1077 = vrot.slane %v1076, 2
        %v1078 = vmax.f32 %v1076, %v1077
        %v1079 = vrot.slane %v1078, 1
        %v1080 = vmax.f32 %v1078, %v1079
        %v1081 = vsel %vm1041, %v958, -inf
        %v1082 = vsel %vm1041, %v961, -inf
        %v1083 = vmax.f32 %v1081, %v1082
        %v1084 = vsel %vm1041, %v966, -inf
        %v1085 = vmax.f32 %v1083, %v1084
        %v1086 = vsel %vm1041, %v969, -inf
        %v1087 = vmax.f32 %v1085, %v1086
        %v1088 = vrot.slane %v1087, 4
        %v1089 = vmax.f32 %v1087, %v1088
        %v1090 = vrot.slane %v1089, 2
        %v1091 = vmax.f32 %v1089, %v1090
        %v1092 = vrot.slane %v1091, 1
        %v1093 = vmax.f32 %v1091, %v1092
        %v1094 = vsel %vm1041, %v974, -inf
        %v1095 = vsel %vm1041, %v977, -inf
        %v1096 = vmax.f32 %v1094, %v1095
        %v1097 = vsel %vm1041, %v982, -inf
        %v1098 = vmax.f32 %v1096, %v1097
        %v1099 = vsel %vm1041, %v985, -inf
        %v1100 = vmax.f32 %v1098, %v1099
        %v1101 = vrot.slane %v1100, 4
        %v1102 = vmax.f32 %v1100, %v1101
        %v1103 = vrot.slane %v1102, 2
        %v1104 = vmax.f32 %v1102, %v1103
        %v1105 = vrot.slane %v1104, 1
        %v1106 = vmax.f32 %v1104, %v1105
        %v1107 = vsel %vm1041, %v990, -inf
        %v1108 = vsel %vm1041, %v993, -inf
        %v1109 = vmax.f32 %v1107, %v1108
        %v1110 = vsel %vm1041, %v998, -inf
        %v1111 = vmax.f32 %v1109, %v1110
        %v1112 = vsel %vm1041, %v1001, -inf
        %v1113 = vmax.f32 %v1111, %v1112
        %v1114 = vrot.slane %v1113, 4
        %v1115 = vmax.f32 %v1113, %v1114
        %v1116 = vrot.slane %v1115, 2
        %v1117 = vmax.f32 %v1115, %v1116
        %v1118 = vrot.slane %v1117, 1
        %v1119 = vmax.f32 %v1117, %v1118
        %v1120 = vsel %vm1041, %v1006, -inf
        %v1121 = vsel %vm1041, %v1009, -inf
        %v1122 = vmax.f32 %v1120, %v1121
        %v1123 = vsel %vm1041, %v1014, -inf
        %v1124 = vmax.f32 %v1122, %v1123
        %v1125 = vsel %vm1041, %v1017, -inf
        %v1126 = vmax.f32 %v1124, %v1125
        %v1127 = vrot.slane %v1126, 4
        %v1128 = vmax.f32 %v1126, %v1127
        %v1129 = vrot.slane %v1128, 2
        %v1130 = vmax.f32 %v1128, %v1129
        %v1131 = vrot.slane %v1130, 1
        %v1132 = vmax.f32 %v1130, %v1131
        %v1133 = vsel %vm1041, %v1022, -inf
        %v1134 = vsel %vm1041, %v1025, -inf
        %v1135 = vmax.f32 %v1133, %v1134
        %v1136 = vsel %vm1041, %v1030, -inf
        %v1137 = vmax.f32 %v1135, %v1136
        %v1138 = vsel %vm1041, %v1033, -inf
        %v1139 = vmax.f32 %v1137, %v1138
        %v1140 = vrot.slane %v1139, 4
        %v1141 = vmax.f32 %v1139, %v1140
        %v1142 = vrot.slane %v1141, 2
        %v1143 = vmax.f32 %v1141, %v1142
        %v1144 = vrot.slane %v1143, 1
        %v1145 = vmax.f32 %v1143, %v1144
        %vm1146 = vcmp.eq.f32.partialorder %v910, %v1054
        %vm1147 = vcmp.eq.f32.partialorder %v913, %v1054
        %vm1148 = vcmp.eq.f32.partialorder %v918, %v1054
        %vm1149 = vcmp.eq.f32.partialorder %v921, %v1054
        %vm1150 = vcmp.eq.f32.partialorder %v926, %v1067
        %vm1151 = vcmp.eq.f32.partialorder %v929, %v1067
        %vm1152 = vcmp.eq.f32.partialorder %v934, %v1067
        %vm1153 = vcmp.eq.f32.partialorder %v937, %v1067
        %vm1154 = vcmp.eq.f32.partialorder %v942, %v1080
        %vm1155 = vcmp.eq.f32.partialorder %v945, %v1080
        %vm1156 = vcmp.eq.f32.partialorder %v950, %v1080
        %vm1157 = vcmp.eq.f32.partialorder %v953, %v1080
        %vm1158 = vcmp.eq.f32.partialorder %v958, %v1093
        %vm1159 = vcmp.eq.f32.partialorder %v961, %v1093
        %vm1160 = vcmp.eq.f32.partialorder %v966, %v1093
        %vm1161 = vcmp.eq.f32.partialorder %v969, %v1093
        %vm1162 = vcmp.eq.f32.partialorder %v974, %v1106
        %vm1163 = vcmp.eq.f32.partialorder %v977, %v1106
        %vm1164 = vcmp.eq.f32.partialorder %v982, %v1106
        %vm1165 = vcmp.eq.f32.partialorder %v985, %v1106
        %vm1166 = vcmp.eq.f32.partialorder %v990, %v1119
        %vm1167 = vcmp.eq.f32.partialorder %v993, %v1119
        %vm1168 = vcmp.eq.f32.partialorder %v998, %v1119
        %vm1169 = vcmp.eq.f32.partialorder %v1001, %v1119
        %vm1170 = vcmp.eq.f32.partialorder %v1006, %v1132
        %vm1171 = vcmp.eq.f32.partialorder %v1009, %v1132
        %vm1172 = vcmp.eq.f32.partialorder %v1014, %v1132
        %vm1173 = vcmp.eq.f32.partialorder %v1017, %v1132
        %vm1174 = vcmp.eq.f32.partialorder %v1022, %v1145
        %vm1175 = vcmp.eq.f32.partialorder %v1025, %v1145
        %vm1176 = vcmp.eq.f32.partialorder %v1030, %v1145
        %vm1177 = vcmp.eq.f32.partialorder %v1033, %v1145
        %v1178 = vsel %vm1146, %v1037, 32
        %v1179 = vsel %vm1147, %v1038, 32
        %v1180 = vsel %vm1148, %v1039, 32
        %v1181 = vsel %vm1149, %v1040, 32
        %v1182 = vsel %vm1150, %v1037, 32
        %v1183 = vsel %vm1151, %v1038, 32
        %v1184 = vsel %vm1152, %v1039, 32
        %v1185 = vsel %vm1153, %v1040, 32
        %v1186 = vsel %vm1154, %v1037, 32
        %v1187 = vsel %vm1155, %v1038, 32
        %v1188 = vsel %vm1156, %v1039, 32
        %v1189 = vsel %vm1157, %v1040, 32
        %v1190 = vsel %vm1158, %v1037, 32
        %v1191 = vsel %vm1159, %v1038, 32
        %v1192 = vsel %vm1160, %v1039, 32
        %v1193 = vsel %vm1161, %v1040, 32
        %v1194 = vsel %vm1162, %v1037, 32
        %v1195 = vsel %vm1163, %v1038, 32
        %v1196 = vsel %vm1164, %v1039, 32
        %v1197 = vsel %vm1165, %v1040, 32
        %v1198 = vsel %vm1166, %v1037, 32
        %v1199 = vsel %vm1167, %v1038, 32
        %v1200 = vsel %vm1168, %v1039, 32
        %v1201 = vsel %vm1169, %v1040, 32
        %v1202 = vsel %vm1170, %v1037, 32
        %v1203 = vsel %vm1171, %v1038, 32
        %v1204 = vsel %vm1172, %v1039, 32
        %v1205 = vsel %vm1173, %v1040, 32
        %v1206 = vsel %vm1174, %v1037, 32
        %v1207 = vsel %vm1175, %v1038, 32
        %v1208 = vsel %vm1176, %v1039, 32
        %v1209 = vsel %vm1177, %v1040, 32
        %v1210 = vsel %vm1041, %v1178, 2147483647
        %v1211 = vsel %vm1041, %v1179, 2147483647
        %vm1212 = vcmp.lt.s32.totalorder %v1210, %v1211
        %v1213 = vsel %vm1212, %v1210, %v1211
        %v1214 = vsel %vm1041, %v1180, 2147483647
        %vm1215 = vcmp.lt.s32.totalorder %v1213, %v1214
        %v1216 = vsel %vm1215, %v1213, %v1214
        %v1217 = vsel %vm1041, %v1181, 2147483647
        %vm1218 = vcmp.lt.s32.totalorder %v1216, %v1217
        %v1219 = vsel %vm1218, %v1216, %v1217
        %v1220 = vrot.slane %v1219, 4
        %vm1221 = vcmp.lt.s32.totalorder %v1219, %v1220
        %v1222 = vsel %vm1221, %v1219, %v1220
        %v1223 = vrot.slane %v1222, 2
        %vm1224 = vcmp.lt.s32.totalorder %v1222, %v1223
        %v1225 = vsel %vm1224, %v1222, %v1223
        %v1226 = vrot.slane %v1225, 1
        %vm1227 = vcmp.lt.s32.totalorder %v1225, %v1226
        %v1228 = vsel %vm1227, %v1225, %v1226
        %v1229 = vsel %vm1041, %v1182, 2147483647
        %v1230 = vsel %vm1041, %v1183, 2147483647
        %vm1231 = vcmp.lt.s32.totalorder %v1229, %v1230
        %v1232 = vsel %vm1231, %v1229, %v1230
        %v1233 = vsel %vm1041, %v1184, 2147483647
        %vm1234 = vcmp.lt.s32.totalorder %v1232, %v1233
        %v1235 = vsel %vm1234, %v1232, %v1233
        %v1236 = vsel %vm1041, %v1185, 2147483647
        %vm1237 = vcmp.lt.s32.totalorder %v1235, %v1236
        %v1238 = vsel %vm1237, %v1235, %v1236
        %v1239 = vrot.slane %v1238, 4
        %vm1240 = vcmp.lt.s32.totalorder %v1238, %v1239
        %v1241 = vsel %vm1240, %v1238, %v1239
        %v1242 = vrot.slane %v1241, 2
        %vm1243 = vcmp.lt.s32.totalorder %v1241, %v1242
        %v1244 = vsel %vm1243, %v1241, %v1242
        %v1245 = vrot.slane %v1244, 1
        %vm1246 = vcmp.lt.s32.totalorder %v1244, %v1245
        %v1247 = vsel %vm1246, %v1244, %v1245
        %v1248 = vsel %vm1041, %v1186, 2147483647
        %v1249 = vsel %vm1041, %v1187, 2147483647
        %vm1250 = vcmp.lt.s32.totalorder %v1248, %v1249
        %v1251 = vsel %vm1250, %v1248, %v1249
        %v1252 = vsel %vm1041, %v1188, 2147483647
        %vm1253 = vcmp.lt.s32.totalorder %v1251, %v1252
        %v1254 = vsel %vm1253, %v1251, %v1252
        %v1255 = vsel %vm1041, %v1189, 2147483647
        %vm1256 = vcmp.lt.s32.totalorder %v1254, %v1255
        %v1257 = vsel %vm1256, %v1254, %v1255
        %v1258 = vrot.slane %v1257, 4
        %vm1259 = vcmp.lt.s32.totalorder %v1257, %v1258
        %v1260 = vsel %vm1259, %v1257, %v1258
        %v1261 = vrot.slane %v1260, 2
        %vm1262 = vcmp.lt.s32.totalorder %v1260, %v1261
        %v1263 = vsel %vm1262, %v1260, %v1261
        %v1264 = vrot.slane %v1263, 1
        %vm1265 = vcmp.lt.s32.totalorder %v1263, %v1264
        %v1266 = vsel %vm1265, %v1263, %v1264
        %v1267 = vsel %vm1041, %v1190, 2147483647
        %v1268 = vsel %vm1041, %v1191, 2147483647
        %vm1269 = vcmp.lt.s32.totalorder %v1267, %v1268
        %v1270 = vsel %vm1269, %v1267, %v1268
        %v1271 = vsel %vm1041, %v1192, 2147483647
        %vm1272 = vcmp.lt.s32.totalorder %v1270, %v1271
        %v1273 = vsel %vm1272, %v1270, %v1271
        %v1274 = vsel %vm1041, %v1193, 2147483647
        %vm1275 = vcmp.lt.s32.totalorder %v1273, %v1274
        %v1276 = vsel %vm1275, %v1273, %v1274
        %v1277 = vrot.slane %v1276, 4
        %vm1278 = vcmp.lt.s32.totalorder %v1276, %v1277
        %v1279 = vsel %vm1278, %v1276, %v1277
        %v1280 = vrot.slane %v1279, 2
        %vm1281 = vcmp.lt.s32.totalorder %v1279, %v1280
        %v1282 = vsel %vm1281, %v1279, %v1280
        %v1283 = vrot.slane %v1282, 1
        %vm1284 = vcmp.lt.s32.totalorder %v1282, %v1283
        %v1285 = vsel %vm1284, %v1282, %v1283
        %v1286 = vsel %vm1041, %v1194, 2147483647
        %v1287 = vsel %vm1041, %v1195, 2147483647
        %vm1288 = vcmp.lt.s32.totalorder %v1286, %v1287
        %v1289 = vsel %vm1288, %v1286, %v1287
        %v1290 = vsel %vm1041, %v1196, 2147483647
        %vm1291 = vcmp.lt.s32.totalorder %v1289, %v1290
        %v1292 = vsel %vm1291, %v1289, %v1290
        %v1293 = vsel %vm1041, %v1197, 2147483647
        %vm1294 = vcmp.lt.s32.totalorder %v1292, %v1293
        %v1295 = vsel %vm1294, %v1292, %v1293
        %v1296 = vrot.slane %v1295, 4
        %vm1297 = vcmp.lt.s32.totalorder %v1295, %v1296
        %v1298 = vsel %vm1297, %v1295, %v1296
        %v1299 = vrot.slane %v1298, 2
        %vm1300 = vcmp.lt.s32.totalorder %v1298, %v1299
        %v1301 = vsel %vm1300, %v1298, %v1299
        %v1302 = vrot.slane %v1301, 1
        %vm1303 = vcmp.lt.s32.totalorder %v1301, %v1302
        %v1304 = vsel %vm1303, %v1301, %v1302
        %v1305 = vsel %vm1041, %v1198, 2147483647
        %v1306 = vsel %vm1041, %v1199, 2147483647
        %vm1307 = vcmp.lt.s32.totalorder %v1305, %v1306
        %v1308 = vsel %vm1307, %v1305, %v1306
        %v1309 = vsel %vm1041, %v1200, 2147483647
        %vm1310 = vcmp.lt.s32.totalorder %v1308, %v1309
        %v1311 = vsel %vm1310, %v1308, %v1309
        %v1312 = vsel %vm1041, %v1201, 2147483647
        %vm1313 = vcmp.lt.s32.totalorder %v1311, %v1312
        %v1314 = vsel %vm1313, %v1311, %v1312
        %v1315 = vrot.slane %v1314, 4
        %vm1316 = vcmp.lt.s32.totalorder %v1314, %v1315
        %v1317 = vsel %vm1316, %v1314, %v1315
        %v1318 = vrot.slane %v1317, 2
        %vm1319 = vcmp.lt.s32.totalorder %v1317, %v1318
        %v1320 = vsel %vm1319, %v1317, %v1318
        %v1321 = vrot.slane %v1320, 1
        %vm1322 = vcmp.lt.s32.totalorder %v1320, %v1321
        %v1323 = vsel %vm1322, %v1320, %v1321
        %v1324 = vsel %vm1041, %v1202, 2147483647
        %v1325 = vsel %vm1041, %v1203, 2147483647
        %vm1326 = vcmp.lt.s32.totalorder %v1324, %v1325
        %v1327 = vsel %vm1326, %v1324, %v1325
        %v1328 = vsel %vm1041, %v1204, 2147483647
        %vm1329 = vcmp.lt.s32.totalorder %v1327, %v1328
        %v1330 = vsel %vm1329, %v1327, %v1328
        %v1331 = vsel %vm1041, %v1205, 2147483647
        %vm1332 = vcmp.lt.s32.totalorder %v1330, %v1331
        %v1333 = vsel %vm1332, %v1330, %v1331
        %v1334 = vrot.slane %v1333, 4
        %vm1335 = vcmp.lt.s32.totalorder %v1333, %v1334
        %v1336 = vsel %vm1335, %v1333, %v1334
        %v1337 = vrot.slane %v1336, 2
        %vm1338 = vcmp.lt.s32.totalorder %v1336, %v1337
        %v1339 = vsel %vm1338, %v1336, %v1337
        %v1340 = vrot.slane %v1339, 1
        %vm1341 = vcmp.lt.s32.totalorder %v1339, %v1340
        %v1342 = vsel %vm1341, %v1339, %v1340
        %v1343 = vsel %vm1041, %v1206, 2147483647
        %v1344 = vsel %vm1041, %v1207, 2147483647
        %vm1345 = vcmp.lt.s32.totalorder %v1343, %v1344
        %v1346 = vsel %vm1345, %v1343, %v1344
        %v1347 = vsel %vm1041, %v1208, 2147483647
        %vm1348 = vcmp.lt.s32.totalorder %v1346, %v1347
        %v1349 = vsel %vm1348, %v1346, %v1347
        %v1350 = vsel %vm1041, %v1209, 2147483647
        %vm1351 = vcmp.lt.s32.totalorder %v1349, %v1350
        %v1352 = vsel %vm1351, %v1349, %v1350
        %v1353 = vrot.slane %v1352, 4
        %vm1354 = vcmp.lt.s32.totalorder %v1352, %v1353
        %v1355 = vsel %vm1354, %v1352, %v1353
        %v1356 = vrot.slane %v1355, 2
        %vm1357 = vcmp.lt.s32.totalorder %v1355, %v1356
        %v1358 = vsel %vm1357, %v1355, %v1356
        %v1359 = vrot.slane %v1358, 1
        %vm1360 = vcmp.lt.s32.totalorder %v1358, %v1359
        %v1361 = vsel %vm1360, %v1358, %v1359
        %vm1362 = vcmp.eq.s32.totalorder %v1037, %v1228
        %vm1363 = vcmp.eq.s32.totalorder %v1038, %v1228
        %vm1364 = vcmp.eq.s32.totalorder %v1039, %v1228
        %vm1365 = vcmp.eq.s32.totalorder %v1040, %v1228
        %vm1366 = vcmp.eq.s32.totalorder %v1037, %v1247
        %vm1367 = vcmp.eq.s32.totalorder %v1038, %v1247
        %vm1368 = vcmp.eq.s32.totalorder %v1039, %v1247
        %vm1369 = vcmp.eq.s32.totalorder %v1040, %v1247
        %vm1370 = vcmp.eq.s32.totalorder %v1037, %v1266
        %vm1371 = vcmp.eq.s32.totalorder %v1038, %v1266
        %vm1372 = vcmp.eq.s32.totalorder %v1039, %v1266
        %vm1373 = vcmp.eq.s32.totalorder %v1040, %v1266
        %vm1374 = vcmp.eq.s32.totalorder %v1037, %v1285
        %vm1375 = vcmp.eq.s32.totalorder %v1038, %v1285
        %vm1376 = vcmp.eq.s32.totalorder %v1039, %v1285
        %vm1377 = vcmp.eq.s32.totalorder %v1040, %v1285
        %vm1378 = vcmp.eq.s32.totalorder %v1037, %v1304
        %vm1379 = vcmp.eq.s32.totalorder %v1038, %v1304
        %vm1380 = vcmp.eq.s32.totalorder %v1039, %v1304
        %vm1381 = vcmp.eq.s32.totalorder %v1040, %v1304
        %vm1382 = vcmp.eq.s32.totalorder %v1037, %v1323
        %vm1383 = vcmp.eq.s32.totalorder %v1038, %v1323
        %vm1384 = vcmp.eq.s32.totalorder %v1039, %v1323
        %vm1385 = vcmp.eq.s32.totalorder %v1040, %v1323
        %vm1386 = vcmp.eq.s32.totalorder %v1037, %v1342
        %vm1387 = vcmp.eq.s32.totalorder %v1038, %v1342
        %vm1388 = vcmp.eq.s32.totalorder %v1039, %v1342
        %vm1389 = vcmp.eq.s32.totalorder %v1040, %v1342
        %vm1390 = vcmp.eq.s32.totalorder %v1037, %v1361
        %vm1391 = vcmp.eq.s32.totalorder %v1038, %v1361
        %vm1392 = vcmp.eq.s32.totalorder %v1039, %v1361
        %vm1393 = vcmp.eq.s32.totalorder %v1040, %v1361
        %v1394 = vsel %vm1362, 1, 0
        %v1395 = vsel %vm1363, 1, 0
        %v1396 = vsel %vm1364, 1, 0
        %v1397 = vsel %vm1365, 1, 0
        %v1398 = vsel %vm1366, 1, 0
        %v1399 = vsel %vm1367, 1, 0
        %v1400 = vsel %vm1368, 1, 0
        %v1401 = vsel %vm1369, 1, 0
        %v1402 = vsel %vm1370, 1, 0
        %v1403 = vsel %vm1371, 1, 0
        %v1404 = vsel %vm1372, 1, 0
        %v1405 = vsel %vm1373, 1, 0
        %v1406 = vsel %vm1374, 1, 0
        %v1407 = vsel %vm1375, 1, 0
        %v1408 = vsel %vm1376, 1, 0
        %v1409 = vsel %vm1377, 1, 0
        %v1410 = vsel %vm1378, 1, 0
        %v1411 = vsel %vm1379, 1, 0
        %v1412 = vsel %vm1380, 1, 0
        %v1413 = vsel %vm1381, 1, 0
        %v1414 = vsel %vm1382, 1, 0
        %v1415 = vsel %vm1383, 1, 0
        %v1416 = vsel %vm1384, 1, 0
        %v1417 = vsel %vm1385, 1, 0
        %v1418 = vsel %vm1386, 1, 0
        %v1419 = vsel %vm1387, 1, 0
        %v1420 = vsel %vm1388, 1, 0
        %v1421 = vsel %vm1389, 1, 0
        %v1422 = vsel %vm1390, 1, 0
        %v1423 = vsel %vm1391, 1, 0
        %v1424 = vsel %vm1392, 1, 0
        %v1425 = vsel %vm1393, 1, 0
        %v1426 = vcvt.s32.f32 %v1394
        %v1427 = vcvt.s32.f32 %v1395
        %v1428 = vcvt.s32.f32 %v1396
        %v1429 = vcvt.s32.f32 %v1397
        %v1430 = vcvt.s32.f32 %v1398
        %v1431 = vcvt.s32.f32 %v1399
        %v1432 = vcvt.s32.f32 %v1400
        %v1433 = vcvt.s32.f32 %v1401
        %v1434 = vcvt.s32.f32 %v1402
        %v1435 = vcvt.s32.f32 %v1403
        %v1436 = vcvt.s32.f32 %v1404
        %v1437 = vcvt.s32.f32 %v1405
        %v1438 = vcvt.s32.f32 %v1406
        %v1439 = vcvt.s32.f32 %v1407
        %v1440 = vcvt.s32.f32 %v1408
        %v1441 = vcvt.s32.f32 %v1409
        %v1442 = vcvt.s32.f32 %v1410
        %v1443 = vcvt.s32.f32 %v1411
        %v1444 = vcvt.s32.f32 %v1412
        %v1445 = vcvt.s32.f32 %v1413
        %v1446 = vcvt.s32.f32 %v1414
        %v1447 = vcvt.s32.f32 %v1415
        %v1448 = vcvt.s32.f32 %v1416
        %v1449 = vcvt.s32.f32 %v1417
        %v1450 = vcvt.s32.f32 %v1418
        %v1451 = vcvt.s32.f32 %v1419
        %v1452 = vcvt.s32.f32 %v1420
        %v1453 = vcvt.s32.f32 %v1421
        %v1454 = vcvt.s32.f32 %v1422
        %v1455 = vcvt.s32.f32 %v1423
        %v1456 = vcvt.s32.f32 %v1424
        %v1457 = vcvt.s32.f32 %v1425
        %1459 = vset.pattern.permute.xlu0 32
        %1460 = vperm.xlu0 %1459, %v1426
        %v1461 = vpop.permute.xlu0 %1460
        %1464 = vset.pattern.permute.xlu0 32
        %1465 = vperm.xlu0 %1464, %v1427
        %v1466 = vpop.permute.xlu0 %1465
        %1469 = vset.pattern.permute.xlu0 32
        %1470 = vperm.xlu0 %1469, %v1428
        %v1471 = vpop.permute.xlu0 %1470
        %1474 = vset.pattern.permute.xlu0 32
        %1475 = vperm.xlu0 %1474, %v1429
        %v1476 = vpop.permute.xlu0 %1475
        %1479 = vset.pattern.permute.xlu0 32
        %1480 = vperm.xlu0 %1479, %v1430
        %v1481 = vpop.permute.xlu0 %1480
        %1484 = vset.pattern.permute.xlu0 32
        %1485 = vperm.xlu0 %1484, %v1431
        %v1486 = vpop.permute.xlu0 %1485
        %1489 = vset.pattern.permute.xlu0 32
        %1490 = vperm.xlu0 %1489, %v1432
        %v1491 = vpop.permute.xlu0 %1490
        %1494 = vset.pattern.permute.xlu0 32
        %1495 = vperm.xlu0 %1494, %v1433
        %v1496 = vpop.permute.xlu0 %1495
        %1499 = vset.pattern.permute.xlu0 32
        %1500 = vperm.xlu0 %1499, %v1434
        %v1501 = vpop.permute.xlu0 %1500
        %1504 = vset.pattern.permute.xlu0 32
        %1505 = vperm.xlu0 %1504, %v1435
        %v1506 = vpop.permute.xlu0 %1505
        %1509 = vset.pattern.permute.xlu0 32
        %1510 = vperm.xlu0 %1509, %v1436
        %v1511 = vpop.permute.xlu0 %1510
        %1514 = vset.pattern.permute.xlu0 32
        %1515 = vperm.xlu0 %1514, %v1437
        %v1516 = vpop.permute.xlu0 %1515
        %1519 = vset.pattern.permute.xlu0 32
        %1520 = vperm.xlu0 %1519, %v1438
        %v1521 = vpop.permute.xlu0 %1520
        %1524 = vset.pattern.permute.xlu0 32
        %1525 = vperm.xlu0 %1524, %v1439
        %v1526 = vpop.permute.xlu0 %1525
        %1529 = vset.pattern.permute.xlu0 32
        %1530 = vperm.xlu0 %1529, %v1440
        %v1531 = vpop.permute.xlu0 %1530
        %1534 = vset.pattern.permute.xlu0 32
        %1535 = vperm.xlu0 %1534, %v1441
        %v1536 = vpop.permute.xlu0 %1535
        %1539 = vset.pattern.permute.xlu0 32
        %1540 = vperm.xlu0 %1539, %v1442
        %v1541 = vpop.permute.xlu0 %1540
        %1544 = vset.pattern.permute.xlu0 32
        %1545 = vperm.xlu0 %1544, %v1443
        %v1546 = vpop.permute.xlu0 %1545
        %1549 = vset.pattern.permute.xlu0 32
        %1550 = vperm.xlu0 %1549, %v1444
        %v1551 = vpop.permute.xlu0 %1550
        %1554 = vset.pattern.permute.xlu0 32
        %1555 = vperm.xlu0 %1554, %v1445
        %v1556 = vpop.permute.xlu0 %1555
        %1559 = vset.pattern.permute.xlu0 32
        %1560 = vperm.xlu0 %1559, %v1446
        %v1561 = vpop.permute.xlu0 %1560
        %1564 = vset.pattern.permute.xlu0 32
        %1565 = vperm.xlu0 %1564, %v1447
        %v1566 = vpop.permute.xlu0 %1565
        %1569 = vset.pattern.permute.xlu0 32
        %1570 = vperm.xlu0 %1569, %v1448
        %v1571 = vpop.permute.xlu0 %1570
        %1574 = vset.pattern.permute.xlu0 32
        %1575 = vperm.xlu0 %1574, %v1449
        %v1576 = vpop.permute.xlu0 %1575
        %1579 = vset.pattern.permute.xlu0 32
        %1580 = vperm.xlu0 %1579, %v1450
        %v1581 = vpop.permute.xlu0 %1580
        %1584 = vset.pattern.permute.xlu0 32
        %1585 = vperm.xlu0 %1584, %v1451
        %v1586 = vpop.permute.xlu0 %1585
        %1589 = vset.pattern.permute.xlu0 32
        %1590 = vperm.xlu0 %1589, %v1452
        %v1591 = vpop.permute.xlu0 %1590
        %1594 = vset.pattern.permute.xlu0 32
        %1595 = vperm.xlu0 %1594, %v1453
        %v1596 = vpop.permute.xlu0 %1595
        %1599 = vset.pattern.permute.xlu0 32
        %1600 = vperm.xlu0 %1599, %v1454
        %v1601 = vpop.permute.xlu0 %1600
        %1604 = vset.pattern.permute.xlu0 32
        %1605 = vperm.xlu0 %1604, %v1455
        %v1606 = vpop.permute.xlu0 %1605
        %1609 = vset.pattern.permute.xlu0 32
        %1610 = vperm.xlu0 %1609, %v1456
        %v1611 = vpop.permute.xlu0 %1610
        %1614 = vset.pattern.permute.xlu0 32
        %1615 = vperm.xlu0 %1614, %v1457
        %v1616 = vpop.permute.xlu0 %1615
        %v1618 = vmul.f32 %v1461, %v910
        %v1619 = vmul.f32 %v1466, %v913
        %v1620 = vmul.f32 %v1471, %v918
        %v1621 = vmul.f32 %v1476, %v921
        %v1622 = vmul.f32 %v1481, %v926
        %v1623 = vmul.f32 %v1486, %v929
        %v1624 = vmul.f32 %v1491, %v934
        %v1625 = vmul.f32 %v1496, %v937
        %v1626 = vmul.f32 %v1501, %v942
        %v1627 = vmul.f32 %v1506, %v945
        %v1628 = vmul.f32 %v1511, %v950
        %v1629 = vmul.f32 %v1516, %v953
        %v1630 = vmul.f32 %v1521, %v958
        %v1631 = vmul.f32 %v1526, %v961
        %v1632 = vmul.f32 %v1531, %v966
        %v1633 = vmul.f32 %v1536, %v969
        %v1634 = vmul.f32 %v1541, %v974
        %v1635 = vmul.f32 %v1546, %v977
        %v1636 = vmul.f32 %v1551, %v982
        %v1637 = vmul.f32 %v1556, %v985
        %v1638 = vmul.f32 %v1561, %v990
        %v1639 = vmul.f32 %v1566, %v993
        %v1640 = vmul.f32 %v1571, %v998
        %v1641 = vmul.f32 %v1576, %v1001
        %v1642 = vmul.f32 %v1581, %v1006
        %v1643 = vmul.f32 %v1586, %v1009
        %v1644 = vmul.f32 %v1591, %v1014
        %v1645 = vmul.f32 %v1596, %v1017
        %v1646 = vmul.f32 %v1601, %v1022
        %v1647 = vmul.f32 %v1606, %v1025
        %v1648 = vmul.f32 %v1611, %v1030
        %v1649 = vmul.f32 %v1616, %v1033
        %v1650 = vsel %vm826, %v1618, 0.0
        %v1651 = vsel %vm826, %v1619, 0.0
        %v1652 = vadd.f32 %v1650, %v1651
        %v1653 = vsel %vm826, %v1620, 0.0
        %v1654 = vadd.f32 %v1652, %v1653
        %v1655 = vsel %vm826, %v1621, 0.0
        %v1656 = vadd.f32 %v1654, %v1655
        %v1657 = vrot.slane %v1656, 4
        %v1658 = vadd.f32 %v1656, %v1657
        %v1659 = vrot.slane %v1658, 2
        %v1660 = vadd.f32 %v1658, %v1659
        %v1661 = vrot.slane %v1660, 1
        %v1662 = vadd.f32 %v1660, %v1661
        %v1663 = vsel %vm826, %v1622, 0.0
        %v1664 = vsel %vm826, %v1623, 0.0
        %v1665 = vadd.f32 %v1663, %v1664
        %v1666 = vsel %vm826, %v1624, 0.0
        %v1667 = vadd.f32 %v1665, %v1666
        %v1668 = vsel %vm826, %v1625, 0.0
        %v1669 = vadd.f32 %v1667, %v1668
        %v1670 = vrot.slane %v1669, 4
        %v1671 = vadd.f32 %v1669, %v1670
        %v1672 = vrot.slane %v1671, 2
        %v1673 = vadd.f32 %v1671, %v1672
        %v1674 = vrot.slane %v1673, 1
        %v1675 = vadd.f32 %v1673, %v1674
        %v1676 = vsel %vm826, %v1626, 0.0
        %v1677 = vsel %vm826, %v1627, 0.0
        %v1678 = vadd.f32 %v1676, %v1677
        %v1679 = vsel %vm826, %v1628, 0.0
        %v1680 = vadd.f32 %v1678, %v1679
        %v1681 = vsel %vm826, %v1629, 0.0
        %v1682 = vadd.f32 %v1680, %v1681
        %v1683 = vrot.slane %v1682, 4
        %v1684 = vadd.f32 %v1682, %v1683
        %v1685 = vrot.slane %v1684, 2
        %v1686 = vadd.f32 %v1684, %v1685
        %v1687 = vrot.slane %v1686, 1
        %v1688 = vadd.f32 %v1686, %v1687
        %v1689 = vsel %vm826, %v1630, 0.0
        %v1690 = vsel %vm826, %v1631, 0.0
        %v1691 = vadd.f32 %v1689, %v1690
        %v1692 = vsel %vm826, %v1632, 0.0
        %v1693 = vadd.f32 %v1691, %v1692
        %v1694 = vsel %vm826, %v1633, 0.0
        %v1695 = vadd.f32 %v1693, %v1694
        %v1696 = vrot.slane %v1695, 4
        %v1697 = vadd.f32 %v1695, %v1696
        %v1698 = vrot.slane %v1697, 2
        %v1699 = vadd.f32 %v1697, %v1698
        %v1700 = vrot.slane %v1699, 1
        %v1701 = vadd.f32 %v1699, %v1700
        %v1702 = vsel %vm826, %v1634, 0.0
        %v1703 = vsel %vm826, %v1635, 0.0
        %v1704 = vadd.f32 %v1702, %v1703
        %v1705 = vsel %vm826, %v1636, 0.0
        %v1706 = vadd.f32 %v1704, %v1705
        %v1707 = vsel %vm826, %v1637, 0.0
        %v1708 = vadd.f32 %v1706, %v1707
        %v1709 = vrot.slane %v1708, 4
        %v1710 = vadd.f32 %v1708, %v1709
        %v1711 = vrot.slane %v1710, 2
        %v1712 = vadd.f32 %v1710, %v1711
        %v1713 = vrot.slane %v1712, 1
        %v1714 = vadd.f32 %v1712, %v1713
        %v1715 = vsel %vm826, %v1638, 0.0
        %v1716 = vsel %vm826, %v1639, 0.0
        %v1717 = vadd.f32 %v1715, %v1716
        %v1718 = vsel %vm826, %v1640, 0.0
        %v1719 = vadd.f32 %v1717, %v1718
        %v1720 = vsel %vm826, %v1641, 0.0
        %v1721 = vadd.f32 %v1719, %v1720
        %v1722 = vrot.slane %v1721, 4
        %v1723 = vadd.f32 %v1721, %v1722
        %v1724 = vrot.slane %v1723, 2
        %v1725 = vadd.f32 %v1723, %v1724
        %v1726 = vrot.slane %v1725, 1
        %v1727 = vadd.f32 %v1725, %v1726
        %v1728 = vsel %vm826, %v1642, 0.0
        %v1729 = vsel %vm826, %v1643, 0.0
        %v1730 = vadd.f32 %v1728, %v1729
        %v1731 = vsel %vm826, %v1644, 0.0
        %v1732 = vadd.f32 %v1730, %v1731
        %v1733 = vsel %vm826, %v1645, 0.0
        %v1734 = vadd.f32 %v1732, %v1733
        %v1735 = vrot.slane %v1734, 4
        %v1736 = vadd.f32 %v1734, %v1735
        %v1737 = vrot.slane %v1736, 2
        %v1738 = vadd.f32 %v1736, %v1737
        %v1739 = vrot.slane %v1738, 1
        %v1740 = vadd.f32 %v1738, %v1739
        %v1741 = vsel %vm826, %v1646, 0.0
        %v1742 = vsel %vm826, %v1647, 0.0
        %v1743 = vadd.f32 %v1741, %v1742
        %v1744 = vsel %vm826, %v1648, 0.0
        %v1745 = vadd.f32 %v1743, %v1744
        %v1746 = vsel %vm826, %v1649, 0.0
        %v1747 = vadd.f32 %v1745, %v1746
        %v1748 = vrot.slane %v1747, 4
        %v1749 = vadd.f32 %v1747, %v1748
        %v1750 = vrot.slane %v1749, 2
        %v1751 = vadd.f32 %v1749, %v1750
        %v1752 = vrot.slane %v1751, 1
        %v1753 = vadd.f32 %v1751, %v1752
        %v1754 = vsub.f32 %v910, %v1662
        %v1755 = vsub.f32 %v913, %v1662
        %v1756 = vsub.f32 %v918, %v1662
        %v1757 = vsub.f32 %v921, %v1662
        %v1758 = vsub.f32 %v926, %v1675
        %v1759 = vsub.f32 %v929, %v1675
        %v1760 = vsub.f32 %v934, %v1675
        %v1761 = vsub.f32 %v937, %v1675
        %v1762 = vsub.f32 %v942, %v1688
        %v1763 = vsub.f32 %v945, %v1688
        %v1764 = vsub.f32 %v950, %v1688
        %v1765 = vsub.f32 %v953, %v1688
        %v1766 = vsub.f32 %v958, %v1701
        %v1767 = vsub.f32 %v961, %v1701
        %v1768 = vsub.f32 %v966, %v1701
        %v1769 = vsub.f32 %v969, %v1701
        %v1770 = vsub.f32 %v974, %v1714
        %v1771 = vsub.f32 %v977, %v1714
        %v1772 = vsub.f32 %v982, %v1714
        %v1773 = vsub.f32 %v985, %v1714
        %v1774 = vsub.f32 %v990, %v1727
        %v1775 = vsub.f32 %v993, %v1727
        %v1776 = vsub.f32 %v998, %v1727
        %v1777 = vsub.f32 %v1001, %v1727
        %v1778 = vsub.f32 %v1006, %v1740
        %v1779 = vsub.f32 %v1009, %v1740
        %v1780 = vsub.f32 %v1014, %v1740
        %v1781 = vsub.f32 %v1017, %v1740
        %v1782 = vsub.f32 %v1022, %v1753
        %v1783 = vsub.f32 %v1025, %v1753
        %v1784 = vsub.f32 %v1030, %v1753
        %v1785 = vsub.f32 %v1033, %v1753
        %v1786 = vlaneseq
        %v1787 = vshrl.u32 %v1786, 7
        %v1788 = vsub.s32 0, %v1787
        %v1789 = vrot.slane %v330, %v1788
        %v1790 = vadd.f32 %v1754, %v1789
        %v1791 = vadd.f32 %v1755, %v1789
        %v1792 = vadd.f32 %v1756, %v1789
        %v1793 = vadd.f32 %v1757, %v1789
        %v1794 = vadd.f32 %v1758, %v1789
        %v1795 = vadd.f32 %v1759, %v1789
        %v1796 = vadd.f32 %v1760, %v1789
        %v1797 = vadd.f32 %v1761, %v1789
        %v1798 = vadd.f32 %v1762, %v1789
        %v1799 = vadd.f32 %v1763, %v1789
        %v1800 = vadd.f32 %v1764, %v1789
        %v1801 = vadd.f32 %v1765, %v1789
        %v1802 = vadd.f32 %v1766, %v1789
        %v1803 = vadd.f32 %v1767, %v1789
        %v1804 = vadd.f32 %v1768, %v1789
        %v1805 = vadd.f32 %v1769, %v1789
        %v1806 = vadd.f32 %v1770, %v1789
        %v1807 = vadd.f32 %v1771, %v1789
        %v1808 = vadd.f32 %v1772, %v1789
        %v1809 = vadd.f32 %v1773, %v1789
        %v1810 = vadd.f32 %v1774, %v1789
        %v1811 = vadd.f32 %v1775, %v1789
        %v1812 = vadd.f32 %v1776, %v1789
        %v1813 = vadd.f32 %v1777, %v1789
        %v1814 = vadd.f32 %v1778, %v1789
        %v1815 = vadd.f32 %v1779, %v1789
        %v1816 = vadd.f32 %v1780, %v1789
        %v1817 = vadd.f32 %v1781, %v1789
        %v1818 = vadd.f32 %v1782, %v1789
        %v1819 = vadd.f32 %v1783, %v1789
        %v1820 = vadd.f32 %v1784, %v1789
        %v1821 = vadd.f32 %v1785, %v1789
        %v1822 = vtanh.pop %v1790
        %v1823 = vtanh.pop %v1791
        %v1824 = vtanh.pop %v1792
        %v1825 = vtanh.pop %v1793
        %v1826 = vtanh.pop %v1794
        %v1827 = vtanh.pop %v1795
        %v1828 = vtanh.pop %v1796
        %v1829 = vtanh.pop %v1797
        %v1830 = vtanh.pop %v1798
        %v1831 = vtanh.pop %v1799
        %v1832 = vtanh.pop %v1800
        %v1833 = vtanh.pop %v1801
        %v1834 = vtanh.pop %v1802
        %v1835 = vtanh.pop %v1803
        %v1836 = vtanh.pop %v1804
        %v1837 = vtanh.pop %v1805
        %v1838 = vtanh.pop %v1806
        %v1839 = vtanh.pop %v1807
        %v1840 = vtanh.pop %v1808
        %v1841 = vtanh.pop %v1809
        %v1842 = vtanh.pop %v1810
        %v1843 = vtanh.pop %v1811
        %v1844 = vtanh.pop %v1812
        %v1845 = vtanh.pop %v1813
        %v1846 = vtanh.pop %v1814
        %v1847 = vtanh.pop %v1815
        %v1848 = vtanh.pop %v1816
        %v1849 = vtanh.pop %v1817
        %v1850 = vtanh.pop %v1818
        %v1851 = vtanh.pop %v1819
        %v1852 = vtanh.pop %v1820
        %v1853 = vtanh.pop %v1821
        %v1854 = vpack.c.bf16 %v1823, %v1822
        %v1855 = vpack.c.bf16 %v1825, %v1824
        %v1856 = vpack.c.bf16 %v1827, %v1826
        %v1857 = vpack.c.bf16 %v1829, %v1828
        %v1858 = vpack.c.bf16 %v1831, %v1830
        %v1859 = vpack.c.bf16 %v1833, %v1832
        %v1860 = vpack.c.bf16 %v1835, %v1834
        %v1861 = vpack.c.bf16 %v1837, %v1836
        %v1862 = vpack.c.bf16 %v1839, %v1838
        %v1863 = vpack.c.bf16 %v1841, %v1840
        %v1864 = vpack.c.bf16 %v1843, %v1842
        %v1865 = vpack.c.bf16 %v1845, %v1844
        %v1866 = vpack.c.bf16 %v1847, %v1846
        %v1867 = vpack.c.bf16 %v1849, %v1848
        %v1868 = vpack.c.bf16 %v1851, %v1850
        %v1869 = vpack.c.bf16 %v1853, %v1852
        %v1870 = vld [vmem:[%s3] sm:$0xf]
        %v1871 = vld [vmem:[%s3 + $0x4] sm:$0xf]
        %v1872 = vld [vmem:[%s3 + $0x8] sm:$0xf]
        %v1873 = vld [vmem:[%s3 + $0xc] sm:$0xf]
        %v1878 = vunpack.c.l.b16 %v1870
        %v1879 = vunpack.c.l.b16 %v1871
        %v1880 = vunpack.c.l.b16 %v1872
        %v1881 = vunpack.c.l.b16 %v1873
        %v1882 = vpack.c.b16 %v1879, %v1878
        %v1883 = vpack.c.b16 %v1881, %v1880
        %v1887 = vsel %vm826, %v1854, 0
        %v1890 = vsel %vm826, %v1855, 0
        %v1893 = vsel %vm826, %v1856, 0
        %v1896 = vsel %vm826, %v1857, 0
        %v1899 = vsel %vm826, %v1858, 0
        %v1902 = vsel %vm826, %v1859, 0
        %v1905 = vsel %vm826, %v1860, 0
        %v1908 = vsel %vm826, %v1861, 0
        %v1911 = vsel %vm826, %v1862, 0
        %v1914 = vsel %vm826, %v1863, 0
        %v1917 = vsel %vm826, %v1864, 0
        %v1920 = vsel %vm826, %v1865, 0
        %v1923 = vsel %vm826, %v1866, 0
        %v1926 = vsel %vm826, %v1867, 0
        %v1929 = vsel %vm826, %v1868, 0
        %v1932 = vsel %vm826, %v1869, 0
        %1934 = vmatprep.subr.bf16.mxu0 0
        %1935 = vmatpush1.bf16.msra.mxu0 0
        %1936 = vmatprep.subr.bf16.mxu0 0
        %1937 = vmatpush1.bf16.msra.mxu0 0
        %1938 = vmatprep.subr.bf16.mxu0 0
        %1939 = vmatpush1.bf16.msra.mxu0 0
        %1940 = vmatprep.subr.bf16.mxu0 0
        %1941 = vmatpush1.bf16.msra.mxu0 0
        %1942 = vmatprep.subr.bf16.mxu0 0
        %1943 = vmatpush1.bf16.msra.mxu0 0
        %1944 = vmatprep.subr.bf16.mxu0 0
        %1945 = vmatpush1.bf16.msra.mxu0 0
        %1946 = vmatprep.subr.bf16.mxu0 0
        %1947 = vmatpush1.bf16.msra.mxu0 %v1883
        %1948 = vmatprep.subr.bf16.mxu0 0
        %1949 = vmatpush1.bf16.msra.mxu0 %v1882
        %1950 = vmatprep.subr.bf16.mxu0 0
        %1951 = vmatpush2.bf16.msra.mxu0 0
        %1952 = vmatprep.subr.bf16.mxu0 0
        %1953 = vmatpush2.bf16.msra.mxu0 0
        %1954 = vmatprep.subr.bf16.mxu0 0
        %1955 = vmatpush2.bf16.msra.mxu0 0
        %1956 = vmatprep.subr.bf16.mxu0 0
        %1957 = vmatpush2.bf16.msra.mxu0 0
        %1958 = vmatprep.subr.bf16.mxu0 0
        %1959 = vmatpush2.bf16.msra.mxu0 0
        %1960 = vmatprep.subr.bf16.mxu0 0
        %1961 = vmatpush2.bf16.msra.mxu0 0
        %1962 = vmatprep.subr.bf16.mxu0 0
        %1963 = vmatpush2.bf16.msra.mxu0 0
        %1964 = vmatprep.subr.bf16.mxu0 0
        %1965 = vmatpush2.bf16.msra.mxu0 0
        %1966 = vmatprep.mubr.bf16.mxu0 0
        %1967 = vmatmul.mubr.bf16.gmra.mxu0 %v1887
        %v1968 = vpop.f32.mrf.mxu0
        %v1969 = vadd.f32 0.0, %v1968
        %v1970 = vpop.f32.mrf.mxu0
        %v1971 = vpop.f32.mrf.mxu0
        %v1972 = vadd.f32 0.0, %v1971
        %v1973 = vpop.f32.mrf.mxu0
        %1974 = vmatprep.mubr.bf16.mxu0 0
        %1975 = vmatmul.mubr.bf16.gmra.mxu0 %v1890
        %v1976 = vpop.f32.mrf.mxu0
        %v1977 = vadd.f32 0.0, %v1976
        %v1978 = vpop.f32.mrf.mxu0
        %v1979 = vpop.f32.mrf.mxu0
        %v1980 = vadd.f32 0.0, %v1979
        %v1981 = vpop.f32.mrf.mxu0
        %1982 = vmatprep.mubr.bf16.mxu0 0
        %1983 = vmatmul.mubr.bf16.gmra.mxu0 %v1893
        %v1984 = vpop.f32.mrf.mxu0
        %v1985 = vadd.f32 0.0, %v1984
        %v1986 = vpop.f32.mrf.mxu0
        %v1987 = vpop.f32.mrf.mxu0
        %v1988 = vadd.f32 0.0, %v1987
        %v1989 = vpop.f32.mrf.mxu0
        %1990 = vmatprep.mubr.bf16.mxu0 0
        %1991 = vmatmul.mubr.bf16.gmra.mxu0 %v1896
        %v1992 = vpop.f32.mrf.mxu0
        %v1993 = vadd.f32 0.0, %v1992
        %v1994 = vpop.f32.mrf.mxu0
        %v1995 = vpop.f32.mrf.mxu0
        %v1996 = vadd.f32 0.0, %v1995
        %v1997 = vpop.f32.mrf.mxu0
        %1998 = vmatprep.mubr.bf16.mxu0 0
        %1999 = vmatmul.mubr.bf16.gmra.mxu0 %v1899
        %v2000 = vpop.f32.mrf.mxu0
        %v2001 = vadd.f32 0.0, %v2000
        %v2002 = vpop.f32.mrf.mxu0
        %v2003 = vpop.f32.mrf.mxu0
        %v2004 = vadd.f32 0.0, %v2003
        %v2005 = vpop.f32.mrf.mxu0
        %2006 = vmatprep.mubr.bf16.mxu0 0
        %2007 = vmatmul.mubr.bf16.gmra.mxu0 %v1902
        %v2008 = vpop.f32.mrf.mxu0
        %v2009 = vadd.f32 0.0, %v2008
        %v2010 = vpop.f32.mrf.mxu0
        %v2011 = vpop.f32.mrf.mxu0
        %v2012 = vadd.f32 0.0, %v2011
        %v2013 = vpop.f32.mrf.mxu0
        %2014 = vmatprep.mubr.bf16.mxu0 0
        %2015 = vmatmul.mubr.bf16.gmra.mxu0 %v1905
        %v2016 = vpop.f32.mrf.mxu0
        %v2017 = vadd.f32 0.0, %v2016
        %v2018 = vpop.f32.mrf.mxu0
        %v2019 = vpop.f32.mrf.mxu0
        %v2020 = vadd.f32 0.0, %v2019
        %v2021 = vpop.f32.mrf.mxu0
        %2022 = vmatprep.mubr.bf16.mxu0 0
        %2023 = vmatmul.mubr.bf16.gmra.mxu0 %v1908
        %v2024 = vpop.f32.mrf.mxu0
        %v2025 = vadd.f32 0.0, %v2024
        %v2026 = vpop.f32.mrf.mxu0
        %v2027 = vpop.f32.mrf.mxu0
        %v2028 = vadd.f32 0.0, %v2027
        %v2029 = vpop.f32.mrf.mxu0
        %2030 = vmatprep.mubr.bf16.mxu0 0
        %2031 = vmatmul.mubr.bf16.gmra.mxu0 %v1911
        %v2032 = vpop.f32.mrf.mxu0
        %v2033 = vadd.f32 0.0, %v2032
        %v2034 = vpop.f32.mrf.mxu0
        %v2035 = vpop.f32.mrf.mxu0
        %v2036 = vadd.f32 0.0, %v2035
        %v2037 = vpop.f32.mrf.mxu0
        %2038 = vmatprep.mubr.bf16.mxu0 0
        %2039 = vmatmul.mubr.bf16.gmra.mxu0 %v1914
        %v2040 = vpop.f32.mrf.mxu0
        %v2041 = vadd.f32 0.0, %v2040
        %v2042 = vpop.f32.mrf.mxu0
        %v2043 = vpop.f32.mrf.mxu0
        %v2044 = vadd.f32 0.0, %v2043
        %v2045 = vpop.f32.mrf.mxu0
        %2046 = vmatprep.mubr.bf16.mxu0 0
        %2047 = vmatmul.mubr.bf16.gmra.mxu0 %v1917
        %v2048 = vpop.f32.mrf.mxu0
        %v2049 = vadd.f32 0.0, %v2048
        %v2050 = vpop.f32.mrf.mxu0
        %v2051 = vpop.f32.mrf.mxu0
        %v2052 = vadd.f32 0.0, %v2051
        %v2053 = vpop.f32.mrf.mxu0
        %2054 = vmatprep.mubr.bf16.mxu0 0
        %2055 = vmatmul.mubr.bf16.gmra.mxu0 %v1920
        %v2056 = vpop.f32.mrf.mxu0
        %v2057 = vadd.f32 0.0, %v2056
        %v2058 = vpop.f32.mrf.mxu0
        %v2059 = vpop.f32.mrf.mxu0
        %v2060 = vadd.f32 0.0, %v2059
        %v2061 = vpop.f32.mrf.mxu0
        %2062 = vmatprep.mubr.bf16.mxu0 0
        %2063 = vmatmul.mubr.bf16.gmra.mxu0 %v1923
        %v2064 = vpop.f32.mrf.mxu0
        %v2065 = vadd.f32 0.0, %v2064
        %v2066 = vpop.f32.mrf.mxu0
        %v2067 = vpop.f32.mrf.mxu0
        %v2068 = vadd.f32 0.0, %v2067
        %v2069 = vpop.f32.mrf.mxu0
        %2070 = vmatprep.mubr.bf16.mxu0 0
        %2071 = vmatmul.mubr.bf16.gmra.mxu0 %v1926
        %v2072 = vpop.f32.mrf.mxu0
        %v2073 = vadd.f32 0.0, %v2072
        %v2074 = vpop.f32.mrf.mxu0
        %v2075 = vpop.f32.mrf.mxu0
        %v2076 = vadd.f32 0.0, %v2075
        %v2077 = vpop.f32.mrf.mxu0
        %2078 = vmatprep.mubr.bf16.mxu0 0
        %2079 = vmatmul.mubr.bf16.gmra.mxu0 %v1929
        %v2080 = vpop.f32.mrf.mxu0
        %v2081 = vadd.f32 0.0, %v2080
        %v2082 = vpop.f32.mrf.mxu0
        %v2083 = vpop.f32.mrf.mxu0
        %v2084 = vadd.f32 0.0, %v2083
        %v2085 = vpop.f32.mrf.mxu0
        %2086 = vmatprep.mubr.bf16.mxu0 0
        %2087 = vmatmul.mubr.bf16.gmra.mxu0 %v1932
        %v2088 = vpop.f32.mrf.mxu0
        %v2089 = vadd.f32 0.0, %v2088
        %v2090 = vpop.f32.mrf.mxu0
        %v2091 = vpop.f32.mrf.mxu0
        %v2092 = vadd.f32 0.0, %v2091
        %v2093 = vpop.f32.mrf.mxu0
        %2094 = vdwg.mxu0
        %vm2095 = vcmask 7168
        %v2096 = vsel %vm2095, %v1969, -inf
        %v2097 = vsel %vm2095, %v1972, -inf
        %v2098 = vmax.f32 %v2096, %v2097
        %v2099 = vsel %vm2095, %v1977, -inf
        %v2100 = vmax.f32 %v2098, %v2099
        %v2101 = vsel %vm2095, %v1980, -inf
        %v2102 = vmax.f32 %v2100, %v2101
        %v2103 = vrot.slane %v2102, 4
        %v2104 = vmax.f32 %v2102, %v2103
        %v2105 = vrot.slane %v2104, 2
        %v2106 = vmax.f32 %v2104, %v2105
        %v2107 = vrot.slane %v2106, 1
        %v2108 = vmax.f32 %v2106, %v2107
        %v2109 = vsel %vm2095, %v1985, -inf
        %v2110 = vsel %vm2095, %v1988, -inf
        %v2111 = vmax.f32 %v2109, %v2110
        %v2112 = vsel %vm2095, %v1993, -inf
        %v2113 = vmax.f32 %v2111, %v2112
        %v2114 = vsel %vm2095, %v1996, -inf
        %v2115 = vmax.f32 %v2113, %v2114
        %v2116 = vrot.slane %v2115, 4
        %v2117 = vmax.f32 %v2115, %v2116
        %v2118 = vrot.slane %v2117, 2
        %v2119 = vmax.f32 %v2117, %v2118
        %v2120 = vrot.slane %v2119, 1
        %v2121 = vmax.f32 %v2119, %v2120
        %v2122 = vsel %vm2095, %v2001, -inf
        %v2123 = vsel %vm2095, %v2004, -inf
        %v2124 = vmax.f32 %v2122, %v2123
        %v2125 = vsel %vm2095, %v2009, -inf
        %v2126 = vmax.f32 %v2124, %v2125
        %v2127 = vsel %vm2095, %v2012, -inf
        %v2128 = vmax.f32 %v2126, %v2127
        %v2129 = vrot.slane %v2128, 4
        %v2130 = vmax.f32 %v2128, %v2129
        %v2131 = vrot.slane %v2130, 2
        %v2132 = vmax.f32 %v2130, %v2131
        %v2133 = vrot.slane %v2132, 1
        %v2134 = vmax.f32 %v2132, %v2133
        %v2135 = vsel %vm2095, %v2017, -inf
        %v2136 = vsel %vm2095, %v2020, -inf
        %v2137 = vmax.f32 %v2135, %v2136
        %v2138 = vsel %vm2095, %v2025, -inf
        %v2139 = vmax.f32 %v2137, %v2138
        %v2140 = vsel %vm2095, %v2028, -inf
        %v2141 = vmax.f32 %v2139, %v2140
        %v2142 = vrot.slane %v2141, 4
        %v2143 = vmax.f32 %v2141, %v2142
        %v2144 = vrot.slane %v2143, 2
        %v2145 = vmax.f32 %v2143, %v2144
        %v2146 = vrot.slane %v2145, 1
        %v2147 = vmax.f32 %v2145, %v2146
        %v2148 = vsel %vm2095, %v2033, -inf
        %v2149 = vsel %vm2095, %v2036, -inf
        %v2150 = vmax.f32 %v2148, %v2149
        %v2151 = vsel %vm2095, %v2041, -inf
        %v2152 = vmax.f32 %v2150, %v2151
        %v2153 = vsel %vm2095, %v2044, -inf
        %v2154 = vmax.f32 %v2152, %v2153
        %v2155 = vrot.slane %v2154, 4
        %v2156 = vmax.f32 %v2154, %v2155
        %v2157 = vrot.slane %v2156, 2
        %v2158 = vmax.f32 %v2156, %v2157
        %v2159 = vrot.slane %v2158, 1
        %v2160 = vmax.f32 %v2158, %v2159
        %v2161 = vsel %vm2095, %v2049, -inf
        %v2162 = vsel %vm2095, %v2052, -inf
        %v2163 = vmax.f32 %v2161, %v2162
        %v2164 = vsel %vm2095, %v2057, -inf
        %v2165 = vmax.f32 %v2163, %v2164
        %v2166 = vsel %vm2095, %v2060, -inf
        %v2167 = vmax.f32 %v2165, %v2166
        %v2168 = vrot.slane %v2167, 4
        %v2169 = vmax.f32 %v2167, %v2168
        %v2170 = vrot.slane %v2169, 2
        %v2171 = vmax.f32 %v2169, %v2170
        %v2172 = vrot.slane %v2171, 1
        %v2173 = vmax.f32 %v2171, %v2172
        %v2174 = vsel %vm2095, %v2065, -inf
        %v2175 = vsel %vm2095, %v2068, -inf
        %v2176 = vmax.f32 %v2174, %v2175
        %v2177 = vsel %vm2095, %v2073, -inf
        %v2178 = vmax.f32 %v2176, %v2177
        %v2179 = vsel %vm2095, %v2076, -inf
        %v2180 = vmax.f32 %v2178, %v2179
        %v2181 = vrot.slane %v2180, 4
        %v2182 = vmax.f32 %v2180, %v2181
        %v2183 = vrot.slane %v2182, 2
        %v2184 = vmax.f32 %v2182, %v2183
        %v2185 = vrot.slane %v2184, 1
        %v2186 = vmax.f32 %v2184, %v2185
        %v2187 = vsel %vm2095, %v2081, -inf
        %v2188 = vsel %vm2095, %v2084, -inf
        %v2189 = vmax.f32 %v2187, %v2188
        %v2190 = vsel %vm2095, %v2089, -inf
        %v2191 = vmax.f32 %v2189, %v2190
        %v2192 = vsel %vm2095, %v2092, -inf
        %v2193 = vmax.f32 %v2191, %v2192
        %v2194 = vrot.slane %v2193, 4
        %v2195 = vmax.f32 %v2193, %v2194
        %v2196 = vrot.slane %v2195, 2
        %v2197 = vmax.f32 %v2195, %v2196
        %v2198 = vrot.slane %v2197, 1
        %v2199 = vmax.f32 %v2197, %v2198
        %v2200 = vsub.f32 %v1969, %v2108
        %v2201 = vsub.f32 %v1972, %v2108
        %v2202 = vsub.f32 %v1977, %v2108
        %v2203 = vsub.f32 %v1980, %v2108
        %v2204 = vsub.f32 %v1985, %v2121
        %v2205 = vsub.f32 %v1988, %v2121
        %v2206 = vsub.f32 %v1993, %v2121
        %v2207 = vsub.f32 %v1996, %v2121
        %v2208 = vsub.f32 %v2001, %v2134
        %v2209 = vsub.f32 %v2004, %v2134
        %v2210 = vsub.f32 %v2009, %v2134
        %v2211 = vsub.f32 %v2012, %v2134
        %v2212 = vsub.f32 %v2017, %v2147
        %v2213 = vsub.f32 %v2020, %v2147
        %v2214 = vsub.f32 %v2025, %v2147
        %v2215 = vsub.f32 %v2028, %v2147
        %v2216 = vsub.f32 %v2033, %v2160
        %v2217 = vsub.f32 %v2036, %v2160
        %v2218 = vsub.f32 %v2041, %v2160
        %v2219 = vsub.f32 %v2044, %v2160
        %v2220 = vsub.f32 %v2049, %v2173
        %v2221 = vsub.f32 %v2052, %v2173
        %v2222 = vsub.f32 %v2057, %v2173
        %v2223 = vsub.f32 %v2060, %v2173
        %v2224 = vsub.f32 %v2065, %v2186
        %v2225 = vsub.f32 %v2068, %v2186
        %v2226 = vsub.f32 %v2073, %v2186
        %v2227 = vsub.f32 %v2076, %v2186
        %v2228 = vsub.f32 %v2081, %v2199
        %v2229 = vsub.f32 %v2084, %v2199
        %v2230 = vsub.f32 %v2089, %v2199
        %v2231 = vsub.f32 %v2092, %v2199
        %v2232 = vmul.f32 %v2200, 1.442695
        %v2233 = vpow.pop %v2232
        %v2234 = vmul.f32 %v2201, 1.442695
        %v2235 = vpow.pop %v2234
        %v2236 = vmul.f32 %v2202, 1.442695
        %v2237 = vpow.pop %v2236
        %v2238 = vmul.f32 %v2203, 1.442695
        %v2239 = vpow.pop %v2238
        %v2240 = vmul.f32 %v2204, 1.442695
        %v2241 = vpow.pop %v2240
        %v2242 = vmul.f32 %v2205, 1.442695
        %v2243 = vpow.pop %v2242
        %v2244 = vmul.f32 %v2206, 1.442695
        %v2245 = vpow.pop %v2244
        %v2246 = vmul.f32 %v2207, 1.442695
        %v2247 = vpow.pop %v2246
        %v2248 = vmul.f32 %v2208, 1.442695
        %v2249 = vpow.pop %v2248
        %v2250 = vmul.f32 %v2209, 1.442695
        %v2251 = vpow.pop %v2250
        %v2252 = vmul.f32 %v2210, 1.442695
        %v2253 = vpow.pop %v2252
        %v2254 = vmul.f32 %v2211, 1.442695
        %v2255 = vpow.pop %v2254
        %v2256 = vmul.f32 %v2212, 1.442695
        %v2257 = vpow.pop %v2256
        %v2258 = vmul.f32 %v2213, 1.442695
        %v2259 = vpow.pop %v2258
        %v2260 = vmul.f32 %v2214, 1.442695
        %v2261 = vpow.pop %v2260
        %v2262 = vmul.f32 %v2215, 1.442695
        %v2263 = vpow.pop %v2262
        %v2264 = vmul.f32 %v2216, 1.442695
        %v2265 = vpow.pop %v2264
        %v2266 = vmul.f32 %v2217, 1.442695
        %v2267 = vpow.pop %v2266
        %v2268 = vmul.f32 %v2218, 1.442695
        %v2269 = vpow.pop %v2268
        %v2270 = vmul.f32 %v2219, 1.442695
        %v2271 = vpow.pop %v2270
        %v2272 = vmul.f32 %v2220, 1.442695
        %v2273 = vpow.pop %v2272
        %v2274 = vmul.f32 %v2221, 1.442695
        %v2275 = vpow.pop %v2274
        %v2276 = vmul.f32 %v2222, 1.442695
        %v2277 = vpow.pop %v2276
        %v2278 = vmul.f32 %v2223, 1.442695
        %v2279 = vpow.pop %v2278
        %v2280 = vmul.f32 %v2224, 1.442695
        %v2281 = vpow.pop %v2280
        %v2282 = vmul.f32 %v2225, 1.442695
        %v2283 = vpow.pop %v2282
        %v2284 = vmul.f32 %v2226, 1.442695
        %v2285 = vpow.pop %v2284
        %v2286 = vmul.f32 %v2227, 1.442695
        %v2287 = vpow.pop %v2286
        %v2288 = vmul.f32 %v2228, 1.442695
        %v2289 = vpow.pop %v2288
        %v2290 = vmul.f32 %v2229, 1.442695
        %v2291 = vpow.pop %v2290
        %v2292 = vmul.f32 %v2230, 1.442695
        %v2293 = vpow.pop %v2292
        %v2294 = vmul.f32 %v2231, 1.442695
        %v2295 = vpow.pop %v2294
        %v2296 = vsel %vm2095, %v2233, 0.0
        %v2297 = vsel %vm2095, %v2235, 0.0
        %v2298 = vadd.f32 %v2296, %v2297
        %v2299 = vsel %vm2095, %v2237, 0.0
        %v2300 = vadd.f32 %v2298, %v2299
        %v2301 = vsel %vm2095, %v2239, 0.0
        %v2302 = vadd.f32 %v2300, %v2301
        %v2303 = vrot.slane %v2302, 4
        %v2304 = vadd.f32 %v2302, %v2303
        %v2305 = vrot.slane %v2304, 2
        %v2306 = vadd.f32 %v2304, %v2305
        %v2307 = vrot.slane %v2306, 1
        %v2308 = vadd.f32 %v2306, %v2307
        %v2309 = vsel %vm2095, %v2241, 0.0
        %v2310 = vsel %vm2095, %v2243, 0.0
        %v2311 = vadd.f32 %v2309, %v2310
        %v2312 = vsel %vm2095, %v2245, 0.0
        %v2313 = vadd.f32 %v2311, %v2312
        %v2314 = vsel %vm2095, %v2247, 0.0
        %v2315 = vadd.f32 %v2313, %v2314
        %v2316 = vrot.slane %v2315, 4
        %v2317 = vadd.f32 %v2315, %v2316
        %v2318 = vrot.slane %v2317, 2
        %v2319 = vadd.f32 %v2317, %v2318
        %v2320 = vrot.slane %v2319, 1
        %v2321 = vadd.f32 %v2319, %v2320
        %v2322 = vsel %vm2095, %v2249, 0.0
        %v2323 = vsel %vm2095, %v2251, 0.0
        %v2324 = vadd.f32 %v2322, %v2323
        %v2325 = vsel %vm2095, %v2253, 0.0
        %v2326 = vadd.f32 %v2324, %v2325
        %v2327 = vsel %vm2095, %v2255, 0.0
        %v2328 = vadd.f32 %v2326, %v2327
        %v2329 = vrot.slane %v2328, 4
        %v2330 = vadd.f32 %v2328, %v2329
        %v2331 = vrot.slane %v2330, 2
        %v2332 = vadd.f32 %v2330, %v2331
        %v2333 = vrot.slane %v2332, 1
        %v2334 = vadd.f32 %v2332, %v2333
        %v2335 = vsel %vm2095, %v2257, 0.0
        %v2336 = vsel %vm2095, %v2259, 0.0
        %v2337 = vadd.f32 %v2335, %v2336
        %v2338 = vsel %vm2095, %v2261, 0.0
        %v2339 = vadd.f32 %v2337, %v2338
        %v2340 = vsel %vm2095, %v2263, 0.0
        %v2341 = vadd.f32 %v2339, %v2340
        %v2342 = vrot.slane %v2341, 4
        %v2343 = vadd.f32 %v2341, %v2342
        %v2344 = vrot.slane %v2343, 2
        %v2345 = vadd.f32 %v2343, %v2344
        %v2346 = vrot.slane %v2345, 1
        %v2347 = vadd.f32 %v2345, %v2346
        %v2348 = vsel %vm2095, %v2265, 0.0
        %v2349 = vsel %vm2095, %v2267, 0.0
        %v2350 = vadd.f32 %v2348, %v2349
        %v2351 = vsel %vm2095, %v2269, 0.0
        %v2352 = vadd.f32 %v2350, %v2351
        %v2353 = vsel %vm2095, %v2271, 0.0
        %v2354 = vadd.f32 %v2352, %v2353
        %v2355 = vrot.slane %v2354, 4
        %v2356 = vadd.f32 %v2354, %v2355
        %v2357 = vrot.slane %v2356, 2
        %v2358 = vadd.f32 %v2356, %v2357
        %v2359 = vrot.slane %v2358, 1
        %v2360 = vadd.f32 %v2358, %v2359
        %v2361 = vsel %vm2095, %v2273, 0.0
        %v2362 = vsel %vm2095, %v2275, 0.0
        %v2363 = vadd.f32 %v2361, %v2362
        %v2364 = vsel %vm2095, %v2277, 0.0
        %v2365 = vadd.f32 %v2363, %v2364
        %v2366 = vsel %vm2095, %v2279, 0.0
        %v2367 = vadd.f32 %v2365, %v2366
        %v2368 = vrot.slane %v2367, 4
        %v2369 = vadd.f32 %v2367, %v2368
        %v2370 = vrot.slane %v2369, 2
        %v2371 = vadd.f32 %v2369, %v2370
        %v2372 = vrot.slane %v2371, 1
        %v2373 = vadd.f32 %v2371, %v2372
        %v2374 = vsel %vm2095, %v2281, 0.0
        %v2375 = vsel %vm2095, %v2283, 0.0
        %v2376 = vadd.f32 %v2374, %v2375
        %v2377 = vsel %vm2095, %v2285, 0.0
        %v2378 = vadd.f32 %v2376, %v2377
        %v2379 = vsel %vm2095, %v2287, 0.0
        %v2380 = vadd.f32 %v2378, %v2379
        %v2381 = vrot.slane %v2380, 4
        %v2382 = vadd.f32 %v2380, %v2381
        %v2383 = vrot.slane %v2382, 2
        %v2384 = vadd.f32 %v2382, %v2383
        %v2385 = vrot.slane %v2384, 1
        %v2386 = vadd.f32 %v2384, %v2385
        %v2387 = vsel %vm2095, %v2289, 0.0
        %v2388 = vsel %vm2095, %v2291, 0.0
        %v2389 = vadd.f32 %v2387, %v2388
        %v2390 = vsel %vm2095, %v2293, 0.0
        %v2391 = vadd.f32 %v2389, %v2390
        %v2392 = vsel %vm2095, %v2295, 0.0
        %v2393 = vadd.f32 %v2391, %v2392
        %v2394 = vrot.slane %v2393, 4
        %v2395 = vadd.f32 %v2393, %v2394
        %v2396 = vrot.slane %v2395, 2
        %v2397 = vadd.f32 %v2395, %v2396
        %v2398 = vrot.slane %v2397, 1
        %v2399 = vadd.f32 %v2397, %v2398
        %v2400 = vrcp.pop %v2308
        %v2401 = vrcp.pop %v2321
        %v2402 = vrcp.pop %v2334
        %v2403 = vrcp.pop %v2347
        %v2404 = vrcp.pop %v2360
        %v2405 = vrcp.pop %v2373
        %v2406 = vrcp.pop %v2386
        %v2407 = vrcp.pop %v2399
        %v2408 = vmul.f32 %v2233, %v2400
        %v2409 = vmul.f32 %v2235, %v2400
        %v2410 = vmul.f32 %v2237, %v2400
        %v2411 = vmul.f32 %v2239, %v2400
        %v2412 = vmul.f32 %v2241, %v2401
        %v2413 = vmul.f32 %v2243, %v2401
        %v2414 = vmul.f32 %v2245, %v2401
        %v2415 = vmul.f32 %v2247, %v2401
        %v2416 = vmul.f32 %v2249, %v2402
        %v2417 = vmul.f32 %v2251, %v2402
        %v2418 = vmul.f32 %v2253, %v2402
        %v2419 = vmul.f32 %v2255, %v2402
        %v2420 = vmul.f32 %v2257, %v2403
        %v2421 = vmul.f32 %v2259, %v2403
        %v2422 = vmul.f32 %v2261, %v2403
        %v2423 = vmul.f32 %v2263, %v2403
        %v2424 = vmul.f32 %v2265, %v2404
        %v2425 = vmul.f32 %v2267, %v2404
        %v2426 = vmul.f32 %v2269, %v2404
        %v2427 = vmul.f32 %v2271, %v2404
        %v2428 = vmul.f32 %v2273, %v2405
        %v2429 = vmul.f32 %v2275, %v2405
        %v2430 = vmul.f32 %v2277, %v2405
        %v2431 = vmul.f32 %v2279, %v2405
        %v2432 = vmul.f32 %v2281, %v2406
        %v2433 = vmul.f32 %v2283, %v2406
        %v2434 = vmul.f32 %v2285, %v2406
        %v2435 = vmul.f32 %v2287, %v2406
        %v2436 = vmul.f32 %v2289, %v2407
        %v2437 = vmul.f32 %v2291, %v2407
        %v2438 = vmul.f32 %v2293, %v2407
        %v2439 = vmul.f32 %v2295, %v2407
        %2441 = vset.pattern.permute.xlu0 0
        %2442 = vperm.xlu0 %2441, %v2408
        %v2443 = vpop.permute.xlu0 %2442
        %2446 = vset.pattern.permute.xlu0 0
        %2447 = vperm.xlu0 %2446, %v2409
        %v2448 = vpop.permute.xlu0 %2447
        %2451 = vset.pattern.permute.xlu0 0
        %2452 = vperm.xlu0 %2451, %v2410
        %v2453 = vpop.permute.xlu0 %2452
        %2456 = vset.pattern.permute.xlu0 0
        %2457 = vperm.xlu0 %2456, %v2411
        %v2458 = vpop.permute.xlu0 %2457
        %2461 = vset.pattern.permute.xlu0 0
        %2462 = vperm.xlu0 %2461, %v2412
        %v2463 = vpop.permute.xlu0 %2462
        %2466 = vset.pattern.permute.xlu0 0
        %2467 = vperm.xlu0 %2466, %v2413
        %v2468 = vpop.permute.xlu0 %2467
        %2471 = vset.pattern.permute.xlu0 0
        %2472 = vperm.xlu0 %2471, %v2414
        %v2473 = vpop.permute.xlu0 %2472
        %2476 = vset.pattern.permute.xlu0 0
        %2477 = vperm.xlu0 %2476, %v2415
        %v2478 = vpop.permute.xlu0 %2477
        %2481 = vset.pattern.permute.xlu0 0
        %2482 = vperm.xlu0 %2481, %v2416
        %v2483 = vpop.permute.xlu0 %2482
        %2486 = vset.pattern.permute.xlu0 0
        %2487 = vperm.xlu0 %2486, %v2417
        %v2488 = vpop.permute.xlu0 %2487
        %2491 = vset.pattern.permute.xlu0 0
        %2492 = vperm.xlu0 %2491, %v2418
        %v2493 = vpop.permute.xlu0 %2492
        %2496 = vset.pattern.permute.xlu0 0
        %2497 = vperm.xlu0 %2496, %v2419
        %v2498 = vpop.permute.xlu0 %2497
        %2501 = vset.pattern.permute.xlu0 0
        %2502 = vperm.xlu0 %2501, %v2420
        %v2503 = vpop.permute.xlu0 %2502
        %2506 = vset.pattern.permute.xlu0 0
        %2507 = vperm.xlu0 %2506, %v2421
        %v2508 = vpop.permute.xlu0 %2507
        %2511 = vset.pattern.permute.xlu0 0
        %2512 = vperm.xlu0 %2511, %v2422
        %v2513 = vpop.permute.xlu0 %2512
        %2516 = vset.pattern.permute.xlu0 0
        %2517 = vperm.xlu0 %2516, %v2423
        %v2518 = vpop.permute.xlu0 %2517
        %2521 = vset.pattern.permute.xlu0 0
        %2522 = vperm.xlu0 %2521, %v2424
        %v2523 = vpop.permute.xlu0 %2522
        %2526 = vset.pattern.permute.xlu0 0
        %2527 = vperm.xlu0 %2526, %v2425
        %v2528 = vpop.permute.xlu0 %2527
        %2531 = vset.pattern.permute.xlu0 0
        %2532 = vperm.xlu0 %2531, %v2426
        %v2533 = vpop.permute.xlu0 %2532
        %2536 = vset.pattern.permute.xlu0 0
        %2537 = vperm.xlu0 %2536, %v2427
        %v2538 = vpop.permute.xlu0 %2537
        %2541 = vset.pattern.permute.xlu0 0
        %2542 = vperm.xlu0 %2541, %v2428
        %v2543 = vpop.permute.xlu0 %2542
        %2546 = vset.pattern.permute.xlu0 0
        %2547 = vperm.xlu0 %2546, %v2429
        %v2548 = vpop.permute.xlu0 %2547
        %2551 = vset.pattern.permute.xlu0 0
        %2552 = vperm.xlu0 %2551, %v2430
        %v2553 = vpop.permute.xlu0 %2552
        %2556 = vset.pattern.permute.xlu0 0
        %2557 = vperm.xlu0 %2556, %v2431
        %v2558 = vpop.permute.xlu0 %2557
        %2561 = vset.pattern.permute.xlu0 0
        %2562 = vperm.xlu0 %2561, %v2432
        %v2563 = vpop.permute.xlu0 %2562
        %2566 = vset.pattern.permute.xlu0 0
        %2567 = vperm.xlu0 %2566, %v2433
        %v2568 = vpop.permute.xlu0 %2567
        %2571 = vset.pattern.permute.xlu0 0
        %2572 = vperm.xlu0 %2571, %v2434
        %v2573 = vpop.permute.xlu0 %2572
        %2576 = vset.pattern.permute.xlu0 0
        %2577 = vperm.xlu0 %2576, %v2435
        %v2578 = vpop.permute.xlu0 %2577
        %2581 = vset.pattern.permute.xlu0 0
        %2582 = vperm.xlu0 %2581, %v2436
        %v2583 = vpop.permute.xlu0 %2582
        %2586 = vset.pattern.permute.xlu0 0
        %2587 = vperm.xlu0 %2586, %v2437
        %v2588 = vpop.permute.xlu0 %2587
        %2591 = vset.pattern.permute.xlu0 0
        %2592 = vperm.xlu0 %2591, %v2438
        %v2593 = vpop.permute.xlu0 %2592
        %2596 = vset.pattern.permute.xlu0 0
        %2597 = vperm.xlu0 %2596, %v2439
        %v2598 = vpop.permute.xlu0 %2597
        %v2600 = vmul.f32 %v2443, %v762
        %v2601 = vmul.f32 %v2448, %v763
        %v2602 = vmul.f32 %v2453, %v764
        %v2603 = vmul.f32 %v2458, %v765
        %v2604 = vmul.f32 %v2463, %v766
        %v2605 = vmul.f32 %v2468, %v767
        %v2606 = vmul.f32 %v2473, %v768
        %v2607 = vmul.f32 %v2478, %v769
        %v2608 = vmul.f32 %v2483, %v770
        %v2609 = vmul.f32 %v2488, %v771
        %v2610 = vmul.f32 %v2493, %v772
        %v2611 = vmul.f32 %v2498, %v773
        %v2612 = vmul.f32 %v2503, %v774
        %v2613 = vmul.f32 %v2508, %v775
        %v2614 = vmul.f32 %v2513, %v776
        %v2615 = vmul.f32 %v2518, %v777
        %v2616 = vmul.f32 %v2523, %v778
        %v2617 = vmul.f32 %v2528, %v779
        %v2618 = vmul.f32 %v2533, %v780
        %v2619 = vmul.f32 %v2538, %v781
        %v2620 = vmul.f32 %v2543, %v782
        %v2621 = vmul.f32 %v2548, %v783
        %v2622 = vmul.f32 %v2553, %v784
        %v2623 = vmul.f32 %v2558, %v785
        %v2624 = vmul.f32 %v2563, %v786
        %v2625 = vmul.f32 %v2568, %v787
        %v2626 = vmul.f32 %v2573, %v788
        %v2627 = vmul.f32 %v2578, %v789
        %v2628 = vmul.f32 %v2583, %v790
        %v2629 = vmul.f32 %v2588, %v791
        %v2630 = vmul.f32 %v2593, %v792
        %v2631 = vmul.f32 %v2598, %v793
        %v2632 = vsel %vm826, %v2600, 0.0
        %v2633 = vsel %vm826, %v2601, 0.0
        %v2634 = vadd.f32 %v2632, %v2633
        %v2635 = vsel %vm826, %v2602, 0.0
        %v2636 = vadd.f32 %v2634, %v2635
        %v2637 = vsel %vm826, %v2603, 0.0
        %v2638 = vadd.f32 %v2636, %v2637
        %v2639 = vrot.slane %v2638, 4
        %v2640 = vadd.f32 %v2638, %v2639
        %v2641 = vrot.slane %v2640, 2
        %v2642 = vadd.f32 %v2640, %v2641
        %v2643 = vrot.slane %v2642, 1
        %v2644 = vadd.f32 %v2642, %v2643
        %v2645 = vsel %vm826, %v2604, 0.0
        %v2646 = vsel %vm826, %v2605, 0.0
        %v2647 = vadd.f32 %v2645, %v2646
        %v2648 = vsel %vm826, %v2606, 0.0
        %v2649 = vadd.f32 %v2647, %v2648
        %v2650 = vsel %vm826, %v2607, 0.0
        %v2651 = vadd.f32 %v2649, %v2650
        %v2652 = vrot.slane %v2651, 4
        %v2653 = vadd.f32 %v2651, %v2652
        %v2654 = vrot.slane %v2653, 2
        %v2655 = vadd.f32 %v2653, %v2654
        %v2656 = vrot.slane %v2655, 1
        %v2657 = vadd.f32 %v2655, %v2656
        %v2658 = vsel %vm826, %v2608, 0.0
        %v2659 = vsel %vm826, %v2609, 0.0
        %v2660 = vadd.f32 %v2658, %v2659
        %v2661 = vsel %vm826, %v2610, 0.0
        %v2662 = vadd.f32 %v2660, %v2661
        %v2663 = vsel %vm826, %v2611, 0.0
        %v2664 = vadd.f32 %v2662, %v2663
        %v2665 = vrot.slane %v2664, 4
        %v2666 = vadd.f32 %v2664, %v2665
        %v2667 = vrot.slane %v2666, 2
        %v2668 = vadd.f32 %v2666, %v2667
        %v2669 = vrot.slane %v2668, 1
        %v2670 = vadd.f32 %v2668, %v2669
        %v2671 = vsel %vm826, %v2612, 0.0
        %v2672 = vsel %vm826, %v2613, 0.0
        %v2673 = vadd.f32 %v2671, %v2672
        %v2674 = vsel %vm826, %v2614, 0.0
        %v2675 = vadd.f32 %v2673, %v2674
        %v2676 = vsel %vm826, %v2615, 0.0
        %v2677 = vadd.f32 %v2675, %v2676
        %v2678 = vrot.slane %v2677, 4
        %v2679 = vadd.f32 %v2677, %v2678
        %v2680 = vrot.slane %v2679, 2
        %v2681 = vadd.f32 %v2679, %v2680
        %v2682 = vrot.slane %v2681, 1
        %v2683 = vadd.f32 %v2681, %v2682
        %v2684 = vsel %vm826, %v2616, 0.0
        %v2685 = vsel %vm826, %v2617, 0.0
        %v2686 = vadd.f32 %v2684, %v2685
        %v2687 = vsel %vm826, %v2618, 0.0
        %v2688 = vadd.f32 %v2686, %v2687
        %v2689 = vsel %vm826, %v2619, 0.0
        %v2690 = vadd.f32 %v2688, %v2689
        %v2691 = vrot.slane %v2690, 4
        %v2692 = vadd.f32 %v2690, %v2691
        %v2693 = vrot.slane %v2692, 2
        %v2694 = vadd.f32 %v2692, %v2693
        %v2695 = vrot.slane %v2694, 1
        %v2696 = vadd.f32 %v2694, %v2695
        %v2697 = vsel %vm826, %v2620, 0.0
        %v2698 = vsel %vm826, %v2621, 0.0
        %v2699 = vadd.f32 %v2697, %v2698
        %v2700 = vsel %vm826, %v2622, 0.0
        %v2701 = vadd.f32 %v2699, %v2700
        %v2702 = vsel %vm826, %v2623, 0.0
        %v2703 = vadd.f32 %v2701, %v2702
        %v2704 = vrot.slane %v2703, 4
        %v2705 = vadd.f32 %v2703, %v2704
        %v2706 = vrot.slane %v2705, 2
        %v2707 = vadd.f32 %v2705, %v2706
        %v2708 = vrot.slane %v2707, 1
        %v2709 = vadd.f32 %v2707, %v2708
        %v2710 = vsel %vm826, %v2624, 0.0
        %v2711 = vsel %vm826, %v2625, 0.0
        %v2712 = vadd.f32 %v2710, %v2711
        %v2713 = vsel %vm826, %v2626, 0.0
        %v2714 = vadd.f32 %v2712, %v2713
        %v2715 = vsel %vm826, %v2627, 0.0
        %v2716 = vadd.f32 %v2714, %v2715
        %v2717 = vrot.slane %v2716, 4
        %v2718 = vadd.f32 %v2716, %v2717
        %v2719 = vrot.slane %v2718, 2
        %v2720 = vadd.f32 %v2718, %v2719
        %v2721 = vrot.slane %v2720, 1
        %v2722 = vadd.f32 %v2720, %v2721
        %v2723 = vsel %vm826, %v2628, 0.0
        %v2724 = vsel %vm826, %v2629, 0.0
        %v2725 = vadd.f32 %v2723, %v2724
        %v2726 = vsel %vm826, %v2630, 0.0
        %v2727 = vadd.f32 %v2725, %v2726
        %v2728 = vsel %vm826, %v2631, 0.0
        %v2729 = vadd.f32 %v2727, %v2728
        %v2730 = vrot.slane %v2729, 4
        %v2731 = vadd.f32 %v2729, %v2730
        %v2732 = vrot.slane %v2731, 2
        %v2733 = vadd.f32 %v2731, %v2732
        %v2734 = vrot.slane %v2733, 1
        %v2735 = vadd.f32 %v2733, %v2734
        %v2736 = vpack.c.bf16 %v2644, %v2644
        %v2737 = vpack.c.bf16 %v2657, %v2657
        %v2738 = vpack.c.bf16 %v2670, %v2670
        %v2739 = vpack.c.bf16 %v2683, %v2683
        %v2740 = vpack.c.bf16 %v2696, %v2696
        %v2741 = vpack.c.bf16 %v2709, %v2709
        %v2742 = vpack.c.bf16 %v2722, %v2722
        %v2743 = vpack.c.bf16 %v2735, %v2735
        %v2744 = vld [vmem:[%s4] sm:$0xf]
        %v2745 = vld [vmem:[%s4 + $0x4] sm:$0xf]
        %v2746 = vld [vmem:[%s4 + $0x8] sm:$0xf]
        %v2747 = vld [vmem:[%s4 + $0xc] sm:$0xf]
        %v2748 = vlaneseq
        %v2749 = vshrl.u32 %v2748, 7
        %v2750 = vsub.s32 0, %v2749
        %v2751 = vrot.slane %v331, %v2750
        %v2760 = vunpack.c.l.b16 %v2736
        %v2761 = vunpack.c.l.b16 %v2737
        %v2762 = vunpack.c.l.b16 %v2738
        %v2763 = vunpack.c.l.b16 %v2739
        %v2764 = vunpack.c.l.b16 %v2740
        %v2765 = vunpack.c.l.b16 %v2741
        %v2766 = vunpack.c.l.b16 %v2742
        %v2767 = vunpack.c.l.b16 %v2743
        %vm2768 = vcmask 1041409
        %v2769 = vsel %vm2768, %v2761, %v2760
        %vm2770 = vcmask 1042434
        %v2771 = vsel %vm2770, %v2762, %v2769
        %vm2772 = vcmask 1043459
        %v2773 = vsel %vm2772, %v2763, %v2771
        %vm2774 = vcmask 1044484
        %v2775 = vsel %vm2774, %v2764, %v2773
        %vm2776 = vcmask 1045509
        %v2777 = vsel %vm2776, %v2765, %v2775
        %vm2778 = vcmask 1046534
        %v2779 = vsel %vm2778, %v2766, %v2777
        %vm2780 = vcmask 1047559
        %v2781 = vsel %vm2780, %v2767, %v2779
        %v2782 = vpack.c.b16 %v2781, %v2781
        %v2787 = vunpack.c.l.b16 %v2744
        %v2788 = vunpack.c.l.b16 %v2745
        %v2789 = vunpack.c.l.b16 %v2746
        %v2790 = vunpack.c.l.b16 %v2747
        %v2791 = vpack.c.b16 %v2788, %v2787
        %v2792 = vpack.c.b16 %v2790, %v2789
        %v2796 = vsel %vm826, %v2782, 0
        %2798 = vmatprep.subr.bf16.mxu0 0
        %2799 = vmatpush1.bf16.msra.mxu0 0
        %2800 = vmatprep.subr.bf16.mxu0 0
        %2801 = vmatpush1.bf16.msra.mxu0 0
        %2802 = vmatprep.subr.bf16.mxu0 0
        %2803 = vmatpush1.bf16.msra.mxu0 0
        %2804 = vmatprep.subr.bf16.mxu0 0
        %2805 = vmatpush1.bf16.msra.mxu0 0
        %2806 = vmatprep.subr.bf16.mxu0 0
        %2807 = vmatpush1.bf16.msra.mxu0 0
        %2808 = vmatprep.subr.bf16.mxu0 0
        %2809 = vmatpush1.bf16.msra.mxu0 0
        %2810 = vmatprep.subr.bf16.mxu0 0
        %2811 = vmatpush1.bf16.msra.mxu0 %v2792
        %2812 = vmatprep.subr.bf16.mxu0 0
        %2813 = vmatpush1.bf16.msra.mxu0 %v2791
        %2814 = vmatprep.subr.bf16.mxu0 0
        %2815 = vmatpush2.bf16.msra.mxu0 0
        %2816 = vmatprep.subr.bf16.mxu0 0
        %2817 = vmatpush2.bf16.msra.mxu0 0
        %2818 = vmatprep.subr.bf16.mxu0 0
        %2819 = vmatpush2.bf16.msra.mxu0 0
        %2820 = vmatprep.subr.bf16.mxu0 0
        %2821 = vmatpush2.bf16.msra.mxu0 0
        %2822 = vmatprep.subr.bf16.mxu0 0
        %2823 = vmatpush2.bf16.msra.mxu0 0
        %2824 = vmatprep.subr.bf16.mxu0 0
        %2825 = vmatpush2.bf16.msra.mxu0 0
        %2826 = vmatprep.subr.bf16.mxu0 0
        %2827 = vmatpush2.bf16.msra.mxu0 0
        %2828 = vmatprep.subr.bf16.mxu0 0
        %2829 = vmatpush2.bf16.msra.mxu0 0
        %2830 = vmatprep.mubr.bf16.mxu0 0
        %2831 = vmatmul.mubr.bf16.gmra.mxu0 %v2796
        %v2832 = vpop.f32.mrf.mxu0
        %v2833 = vadd.f32 %v2751, %v2832
        %v2834 = vpop.f32.mrf.mxu0
        %v2835 = vpop.f32.mrf.mxu0
        %v2836 = vpop.f32.mrf.mxu0
        %2837 = vdwg.mxu0
        %v2838 = vpack.c.bf16 %v2833, %v2833
        %v2839 = vld [vmem:[%s5] sm:$0xf]
        %v2840 = vld [vmem:[%s5 + $0x4] sm:$0xf]
        %v2841 = vld [vmem:[%s5 + $0x8] sm:$0xf]
        %v2842 = vld [vmem:[%s5 + $0xc] sm:$0xf]
        %v2843 = vld [vmem:[%s7] sm:$0x1]
        %v2845 = vlaneseq
        %v2846 = vshrl.u32 %v2845, 7
        %v2847 = vsub.s32 0, %v2846
        %v2848 = vrot.slane %v2843, %v2847
        %v2854 = vunpack.c.l.b16 %v2839
        %v2855 = vunpack.c.l.b16 %v2840
        %v2856 = vunpack.c.l.b16 %v2841
        %v2857 = vunpack.c.l.b16 %v2842
        %v2858 = vpack.c.b16 %v2855, %v2854
        %v2859 = vpack.c.b16 %v2857, %v2856
        %v2863 = vsel %vm826, %v2838, 0
        %2865 = vmatprep.subr.bf16.mxu0 0
        %2866 = vmatpush1.bf16.msra.mxu0 0
        %2867 = vmatprep.subr.bf16.mxu0 0
        %2868 = vmatpush1.bf16.msra.mxu0 0
        %2869 = vmatprep.subr.bf16.mxu0 0
        %2870 = vmatpush1.bf16.msra.mxu0 0
        %2871 = vmatprep.subr.bf16.mxu0 0
        %2872 = vmatpush1.bf16.msra.mxu0 0
        %2873 = vmatprep.subr.bf16.mxu0 0
        %2874 = vmatpush1.bf16.msra.mxu0 0
        %2875 = vmatprep.subr.bf16.mxu0 0
        %2876 = vmatpush1.bf16.msra.mxu0 0
        %2877 = vmatprep.subr.bf16.mxu0 0
        %2878 = vmatpush1.bf16.msra.mxu0 %v2859
        %2879 = vmatprep.subr.bf16.mxu0 0
        %2880 = vmatpush1.bf16.msra.mxu0 %v2858
        %2881 = vmatprep.subr.bf16.mxu0 0
        %2882 = vmatpush2.bf16.msra.mxu0 0
        %2883 = vmatprep.subr.bf16.mxu0 0
        %2884 = vmatpush2.bf16.msra.mxu0 0
        %2885 = vmatprep.subr.bf16.mxu0 0
        %2886 = vmatpush2.bf16.msra.mxu0 0
        %2887 = vmatprep.subr.bf16.mxu0 0
        %2888 = vmatpush2.bf16.msra.mxu0 0
        %2889 = vmatprep.subr.bf16.mxu0 0
        %2890 = vmatpush2.bf16.msra.mxu0 0
        %2891 = vmatprep.subr.bf16.mxu0 0
        %2892 = vmatpush2.bf16.msra.mxu0 0
        %2893 = vmatprep.subr.bf16.mxu0 0
        %2894 = vmatpush2.bf16.msra.mxu0 0
        %2895 = vmatprep.subr.bf16.mxu0 0
        %2896 = vmatpush2.bf16.msra.mxu0 0
        %2897 = vmatprep.mubr.bf16.mxu0 0
        %2898 = vmatmul.mubr.bf16.gmra.mxu0 %v2863
        %v2899 = vpop.f32.mrf.mxu0
        %v2900 = vadd.f32 %v2848, %v2899
        %v2901 = vpop.f32.mrf.mxu0
        %v2902 = vpop.f32.mrf.mxu0
        %v2903 = vpop.f32.mrf.mxu0
        %2904 = vdwg.mxu0
        %2905 = vst [vmem:[%s324] sm:$0xff] %v2900
        %s2906 = sand.u32 %s206, 1
        %s2907 = scalar_lea.sflag [#allocation4], %s2906
        %s2908 = sand.u32 %s206, 1
        %s2909 = smul.addr %s2908, 8
        %s2910 = scalar_lea.vmem [#allocation5], %s2909
        // Predicated region
        $region57: #{tpu_custom_call.1} parent=51 // pred_check
          %p2911 = pneg %p216
        $region58: #{tpu_custom_call.1} parent=51 // pred_check_branch
          %2913 = sbr.rel (%p2911) target = $region60
        $region59: #{tpu_custom_call.1} parent=51 // pred_region
          %s2915 = ssub.s32 128, 128
          %2916 = vsyncadd %s2907, %s2915
          %s2917 = smul.addr %s25, 128
          %s2918 = scalar_lea.hbm %s8, %s2917
          %s2920 = sshll.u32 %s2910, 4
          %s2921 = int_to_ptr.vmem [resolvable:$true] %s2920
          %2923 = dma.vmem_to_hbm [thread:$0]  %s2921, 128, %s2918, %s2907
        $region60: #{tpu_custom_call.1} parent=51 // pred_fallthru
          _
      $region52: #{tpu_custom_call.1} parent=5 // pred_fallthru
        _
      %p2924 = scmp.le.s32.totalorder 2, %s20
      // Predicated region
      $region61: #{tpu_custom_call.1} parent=5 // pred_check
        %p2925 = pneg %p2924
      $region62: #{tpu_custom_call.1} parent=5 // pred_check_branch
        %2927 = sbr.rel (%p2925) target = $region64
      $region63: #{tpu_custom_call.1} parent=5 // pred_region
        %s2928 = ssub.s32 %s20, 2
        // Predicated region
        $region65: #{tpu_custom_call.1} parent=63 // pred_check
          %p2929 = pneg %p222
        $region66: #{tpu_custom_call.1} parent=63 // pred_check_branch
          %2931 = sbr.rel (%p2929) target = $region68
        $region67: #{tpu_custom_call.1} parent=63 // pred_region
          %s2932 = sand.u32 %s207, 1
          %s2933 = scalar_lea.sflag [#allocation4], %s2932
          %s2934 = sand.u32 %s207, 1
          %s2935 = smul.addr %s2934, 8
          %s2936 = scalar_lea.vmem [#allocation5], %s2935
          %2937 = dma.done %s2933, 128
        $region68: #{tpu_custom_call.1} parent=63 // pred_fallthru
          _
      $region64: #{tpu_custom_call.1} parent=5 // pred_fallthru
        _
    $region6: #{tpu_custom_call.1} parent=1 // loop_footer
      %s24 = sadd.s32 1, %s20
    $region7: #{tpu_custom_call.1} parent=1 // loop_footer_branch
      %19 = sbr.rel target = $region3
    $region8: #{tpu_custom_call.1} parent=1 // loop_exit
      _
    %2938 = vsyncpa [#allocation3], 1
    %s2939 = scalar_lea.sflag [#allocation3], 1
    %2940 = vsyncpa %s2939, 1
    %2941 = vsyncpa [#allocation4], 1
    %s2942 = scalar_lea.sflag [#allocation4], 1
    %2943 = vsyncpa %s2942, 1

</llo_original>
